<compile_context>
chip_gen: v7x
topology: tpu7x:2x2x1
jax: 0.10.0
libtpu: 0.0.40
codegen_flags: <defaults>
</compile_context>

<pallas_src>
import functools

import jax
import jax.numpy as jnp
from jax.experimental import pallas as pl
from jax.experimental.pallas import tpu as pltpu


def _leaky_relu(x, slope=0.2):
    # For slope in (0, 1): max(x, slope*x) == LeakyReLU(slope).
    # mul+max (2 VALU ops) instead of cmp+mul+select (3).
    return jnp.maximum(x, slope * x)


def _cdiv(a, b):
    return -(-a // b)


def _round_up(n, m):
    return _cdiv(n, m) * m


def discriminator_kernel(x_ref, w1_ref, b1_ref, w2_ref, b2_ref, w3_ref, b3_ref,
                         o_ref):
    """Fused 3-layer MLP + activations for one batch tile.

    Layers 1/2 run on the MXU with bf16 operands and f32 accumulation; the
    final (latent_dim -> 1) projection is a VPU multiply + XLU lane reduction,
    and bias/LeakyReLU/sigmoid run on the VPU/EUP in f32.
    """
    # x arrives f32 (single HBM pass); cast to bf16 in-register for the MXU.
    x = x_ref[...].astype(jnp.bfloat16)                         # (tb, D_in)

    # Layer 1: Linear(input_dim -> 2*latent_dim) + LeakyReLU(0.2)
    h1 = jnp.dot(x, w1_ref[...], preferred_element_type=jnp.float32)
    h1 = _leaky_relu(h1 + b1_ref[...])                          # (tb, 2L) f32

    # Layer 2: Linear(2*latent_dim -> latent_dim) + LeakyReLU(0.2)
    h2 = jnp.dot(h1.astype(jnp.bfloat16), w2_ref[...],
                 preferred_element_type=jnp.float32)
    h2 = _leaky_relu(h2 + b2_ref[...])                          # (tb, L) f32

    # Layer 3: Linear(latent_dim -> 1) + Sigmoid as a lane-reduce (no MXU).
    # w3_ref is a (1, L) f32 row, broadcast across the batch sublanes.
    logits = jnp.sum(h2 * w3_ref[...], axis=-1, keepdims=True)  # (tb, 1)
    logits = logits + b3_ref[...]
    o_ref[...] = jax.nn.sigmoid(logits).astype(o_ref.dtype)


def _choose_batch_tile(B, tile_b):
    """Pick the batch tile: big (amortize grid-step overhead), low padding
    waste, and >=2 grid steps when possible so both v7x TCs get work."""
    tile_b = max(16, (tile_b // 16) * 16)
    n_tiles = _cdiv(B, tile_b)
    if n_tiles < 2 and B > 16:
        n_tiles = 2                      # v7x megacore: shard batch axis
    return _round_up(_cdiv(B, n_tiles), 16)


@functools.partial(jax.jit, static_argnames=("tile_b",))
def discriminator_forward(x, params, tile_b=512):
    """x: (B, input_dim) float32 -> (B, 1) float32 in [0, 1]."""
    B, d_in = x.shape

    # Weights for the MXU cast to bf16 once (tiny: ~1.2 MiB); biases and the
    # final projection row stay f32 (VPU/XLU work).
    w1 = params["w1"].astype(jnp.bfloat16)                      # (D_in, 2L)
    w2 = params["w2"].astype(jnp.bfloat16)                      # (2L, L)
    b1 = params["b1"].reshape(1, -1).astype(jnp.float32)        # (1, 2L)
    b2 = params["b2"].reshape(1, -1).astype(jnp.float32)        # (1, L)
    w3_row = params["w3"].reshape(1, -1).astype(jnp.float32)    # (1, L)
    b3 = params["b3"].reshape(1, 1).astype(jnp.float32)         # (1, 1)
    d_h1 = w1.shape[1]
    d_h2 = w2.shape[1]

    tb = _choose_batch_tile(B, tile_b)
    b_pad = _round_up(B, tb)
    # x stays f32: the bf16 cast happens inside the kernel (one HBM pass).
    x_p = x.astype(jnp.float32)
    if b_pad != B:
        x_p = jnp.pad(x_p, ((0, b_pad - B), (0, 0)))

    grid = (b_pad // tb,)
    full = lambda i: (0, 0)   # weights/biases: single resident block
    out = pl.pallas_call(
        discriminator_kernel,
        out_shape=jax.ShapeDtypeStruct((b_pad, 1), jnp.float32),
        grid=grid,
        in_specs=[
            pl.BlockSpec((tb, d_in), lambda i: (i, 0)),          # x tile (f32)
            pl.BlockSpec((d_in, d_h1), full),                    # w1 (bf16)
            pl.BlockSpec((1, d_h1), full),                       # b1 (f32)
            pl.BlockSpec((d_h1, d_h2), full),                    # w2 (bf16)
            pl.BlockSpec((1, d_h2), full),                       # b2 (f32)
            pl.BlockSpec((1, d_h2), full),                       # w3 row (f32)
            pl.BlockSpec((1, 1), full),                          # b3 (f32)
        ],
        out_specs=pl.BlockSpec((tb, 1), lambda i: (i, 0)),
        compiler_params=pltpu.CompilerParams(
            dimension_semantics=("parallel",)),
    )(x_p, w1, b1, w2, b2, w3_row, b3)
    return out[:B]


def init_params(key, input_dim=28 * 28, latent_dim=256):
    """Deterministic synthetic parameters (shapes match the PyTorch module,
    stored (in_features, out_features))."""
    k1, k2, k3 = jax.random.split(key, 3)
    scale = 0.02
    return {
        "w1": scale * jax.random.normal(k1, (input_dim, 2 * latent_dim),
                                        jnp.float32),
        "b1": jnp.zeros((1, 2 * latent_dim), jnp.float32),
        "w2": scale * jax.random.normal(k2, (2 * latent_dim, latent_dim),
                                        jnp.float32),
        "b2": jnp.zeros((1, latent_dim), jnp.float32),
        "w3": scale * jax.random.normal(k3, (latent_dim, 1), jnp.float32),
        "b3": jnp.zeros((1, 1), jnp.float32),
    }


def reference_forward(x, params):
    """Pure-JAX f32 reference of the same forward pass (for sanity check)."""
    h1 = _leaky_relu(x @ params["w1"] + params["b1"])
    h2 = _leaky_relu(h1 @ params["w2"] + params["b2"])
    return jax.nn.sigmoid(h2 @ params["w3"] + params["b3"])


if __name__ == "__main__":
    key = jax.random.PRNGKey(0)
    kx1, kx2, kp = jax.random.split(key, 3)

    INPUT_DIM = 28 * 28   # 784, module default
    LATENT_DIM = 256      # module default
    params = init_params(kp, INPUT_DIM, LATENT_DIM)

    # Small demo batch (single 16-row tile path).
    x_small = jax.random.normal(kx1, (8, INPUT_DIM), jnp.float32)
    y_small = jax.block_until_ready(discriminator_forward(x_small, params))
    assert y_small.shape == (8, 1)
    err_small = jnp.max(jnp.abs(y_small - reference_forward(x_small, params)))
    # bf16 MXU operands vs. f32 reference -> relaxed tolerance (expected
    # precision loss, not a kernel bug).
    assert err_small < 2e-2, f"small-batch mismatch vs reference: {err_small}"

    # Irregular batch: exercises the multi-tile (2 x 160) + padding path.
    x_big = jax.random.normal(kx2, (300, INPUT_DIM), jnp.float32)
    y_big = jax.block_until_ready(discriminator_forward(x_big, params))
    assert y_big.shape == (300, 1)
    err_big = jnp.max(jnp.abs(y_big - reference_forward(x_big, params)))
    assert err_big < 2e-2, f"large-batch mismatch vs reference: {err_big}"

    print("KERNEL_OK")
</pallas_src>

<mosaic_0001>
module attributes {stable_mosaic.version = 11 : i64} {
  func.func @discriminator_kernel(%arg0: i32, %arg1: memref<16x784xf32, #tpu.memory_space<vmem>>, %arg2: memref<784x512xbf16, #tpu.memory_space<vmem>>, %arg3: memref<1x512xf32, #tpu.memory_space<vmem>>, %arg4: memref<512x256xbf16, #tpu.memory_space<vmem>>, %arg5: memref<1x256xf32, #tpu.memory_space<vmem>>, %arg6: memref<1x256xf32, #tpu.memory_space<vmem>>, %arg7: memref<1x1xf32, #tpu.memory_space<vmem>>, %arg8: memref<16x1xf32, #tpu.memory_space<vmem>>) attributes {dimension_semantics = [#tpu.dimension_semantics<parallel>], iteration_bounds = array<i64: 1>, scalar_prefetch = 0 : i64, scratch_operands = 0 : i64, tpu.core_type = #tpu.core_type<tc>, window_params = [{transform_indices = @transform_0, window_bounds = array<i64: 16, 784>}, {pipeline_mode = #tpu.pipeline_mode<synchronous>, transform_indices = @transform_1, window_bounds = array<i64: 784, 512>}, {pipeline_mode = #tpu.pipeline_mode<synchronous>, transform_indices = @transform_2, window_bounds = array<i64: 1, 512>}, {pipeline_mode = #tpu.pipeline_mode<synchronous>, transform_indices = @transform_3, window_bounds = array<i64: 512, 256>}, {pipeline_mode = #tpu.pipeline_mode<synchronous>, transform_indices = @transform_4, window_bounds = array<i64: 1, 256>}, {pipeline_mode = #tpu.pipeline_mode<synchronous>, transform_indices = @transform_5, window_bounds = array<i64: 1, 256>}, {pipeline_mode = #tpu.pipeline_mode<synchronous>, transform_indices = @transform_6, window_bounds = array<i64: 1, 1>}, {transform_indices = @transform_7, window_bounds = array<i64: 16, 1>}]} {
    %c0 = arith.constant 0 : index
    %c0_0 = arith.constant 0 : index
    %0 = vector.load %arg1[%c0, %c0_0] : memref<16x784xf32, #tpu.memory_space<vmem>>, vector<16x784xf32>
    %1 = arith.truncf %0 : vector<16x784xf32> to vector<16x784xbf16>
    %c0_1 = arith.constant 0 : index
    %c0_2 = arith.constant 0 : index
    %2 = vector.load %arg2[%c0_1, %c0_2] : memref<784x512xbf16, #tpu.memory_space<vmem>>, vector<784x512xbf16>
    %cst = arith.constant dense<0.000000e+00> : vector<16x512xf32>
    %3 = tpu.matmul %1, %2, %cst {dimension_numbers = #tpu.dot_dimension_numbers<[1], [0], [0], [1], [0, 0, 1, 1], [], []>} : vector<16x784xbf16>, vector<784x512xbf16>, vector<16x512xf32> -> vector<16x512xf32>
    %c0_3 = arith.constant 0 : index
    %c0_4 = arith.constant 0 : index
    %4 = vector.load %arg3[%c0_3, %c0_4] : memref<1x512xf32, #tpu.memory_space<vmem>>, vector<1x512xf32>
    %5 = vector.broadcast %4 : vector<1x512xf32> to vector<16x512xf32>
    %6 = arith.addf %3, %5 : vector<16x512xf32>
    %cst_5 = arith.constant 2.000000e-01 : f32
    %7 = vector.broadcast %cst_5 : f32 to vector<16x512xf32>
    %8 = arith.mulf %7, %6 : vector<16x512xf32>
    %9 = arith.maximumf %6, %8 : vector<16x512xf32>
    %10 = arith.truncf %9 : vector<16x512xf32> to vector<16x512xbf16>
    %c0_6 = arith.constant 0 : index
    %c0_7 = arith.constant 0 : index
    %11 = vector.load %arg4[%c0_6, %c0_7] : memref<512x256xbf16, #tpu.memory_space<vmem>>, vector<512x256xbf16>
    %cst_8 = arith.constant dense<0.000000e+00> : vector<16x256xf32>
    %12 = tpu.matmul %10, %11, %cst_8 {dimension_numbers = #tpu.dot_dimension_numbers<[1], [0], [0], [1], [0, 0, 1, 1], [], []>} : vector<16x512xbf16>, vector<512x256xbf16>, vector<16x256xf32> -> vector<16x256xf32>
    %c0_9 = arith.constant 0 : index
    %c0_10 = arith.constant 0 : index
    %13 = vector.load %arg5[%c0_9, %c0_10] : memref<1x256xf32, #tpu.memory_space<vmem>>, vector<1x256xf32>
    %14 = vector.broadcast %13 : vector<1x256xf32> to vector<16x256xf32>
    %15 = arith.addf %12, %14 : vector<16x256xf32>
    %cst_11 = arith.constant 2.000000e-01 : f32
    %16 = vector.broadcast %cst_11 : f32 to vector<16x256xf32>
    %17 = arith.mulf %16, %15 : vector<16x256xf32>
    %18 = arith.maximumf %15, %17 : vector<16x256xf32>
    %c0_12 = arith.constant 0 : index
    %c0_13 = arith.constant 0 : index
    %19 = vector.load %arg6[%c0_12, %c0_13] : memref<1x256xf32, #tpu.memory_space<vmem>>, vector<1x256xf32>
    %20 = vector.broadcast %19 : vector<1x256xf32> to vector<16x256xf32>
    %21 = arith.mulf %18, %20 : vector<16x256xf32>
    %cst_14 = arith.constant dense<0.000000e+00> : vector<16xf32>
    %22 = vector.multi_reduction <add>, %21, %cst_14 [1] : vector<16x256xf32> to vector<16xf32>
    %23 = vector.shape_cast %22 : vector<16xf32> to vector<16x1xf32>
    %c0_15 = arith.constant 0 : index
    %c0_16 = arith.constant 0 : index
    %24 = vector.load %arg7[%c0_15, %c0_16] : memref<1x1xf32, #tpu.memory_space<vmem>>, vector<1x1xf32>
    %25 = vector.broadcast %24 : vector<1x1xf32> to vector<16x1xf32>
    %26 = arith.addf %23, %25 : vector<16x1xf32>
    %27 = arith.negf %26 : vector<16x1xf32>
    %28 = math.exp %27 : vector<16x1xf32>
    %cst_17 = arith.constant 1.000000e+00 : f32
    %29 = vector.broadcast %cst_17 : f32 to vector<16x1xf32>
    %30 = arith.addf %29, %28 : vector<16x1xf32>
    %31 = arith.divf %29, %30 : vector<16x1xf32>
    %c0_18 = arith.constant 0 : index
    %c0_19 = arith.constant 0 : index
    %32 = vector.load %arg8[%c0_18, %c0_19] : memref<16x1xf32, #tpu.memory_space<vmem>>, vector<16x1xf32>
    tpu.vector_store %arg8[%c0_18, %c0_19], %31 {strides = array<i32>} : memref<16x1xf32, #tpu.memory_space<vmem>>, vector<16x1xf32>,
    return
  }
  func.func @transform_0(%arg0: i32) -> (i32, i32) {
    %c0_i32 = arith.constant 0 : i32
    %c0_i32_0 = arith.constant 0 : i32
    return %arg0, %c0_i32 : i32, i32
  }
  func.func @transform_1(%arg0: i32) -> (i32, i32) {
    %c0_i32 = arith.constant 0 : i32
    %c0_i32_0 = arith.constant 0 : i32
    %c0_i32_1 = arith.constant 0 : i32
    return %c0_i32, %c0_i32_0 : i32, i32
  }
  func.func @transform_2(%arg0: i32) -> (i32, i32) {
    %c0_i32 = arith.constant 0 : i32
    %c0_i32_0 = arith.constant 0 : i32
    %c0_i32_1 = arith.constant 0 : i32
    return %c0_i32, %c0_i32_0 : i32, i32
  }
  func.func @transform_3(%arg0: i32) -> (i32, i32) {
    %c0_i32 = arith.constant 0 : i32
    %c0_i32_0 = arith.constant 0 : i32
    %c0_i32_1 = arith.constant 0 : i32
    return %c0_i32, %c0_i32_0 : i32, i32
  }
  func.func @transform_4(%arg0: i32) -> (i32, i32) {
    %c0_i32 = arith.constant 0 : i32
    %c0_i32_0 = arith.constant 0 : i32
    %c0_i32_1 = arith.constant 0 : i32
    return %c0_i32, %c0_i32_0 : i32, i32
  }
  func.func @transform_5(%arg0: i32) -> (i32, i32) {
    %c0_i32 = arith.constant 0 : i32
    %c0_i32_0 = arith.constant 0 : i32
    %c0_i32_1 = arith.constant 0 : i32
    return %c0_i32, %c0_i32_0 : i32, i32
  }
  func.func @transform_6(%arg0: i32) -> (i32, i32) {
    %c0_i32 = arith.constant 0 : i32
    %c0_i32_0 = arith.constant 0 : i32
    %c0_i32_1 = arith.constant 0 : i32
    return %c0_i32, %c0_i32_0 : i32, i32
  }
  func.func @transform_7(%arg0: i32) -> (i32, i32) {
    %c0_i32 = arith.constant 0 : i32
    %c0_i32_0 = arith.constant 0 : i32
    return %arg0, %c0_i32 : i32, i32
  }
}

</mosaic_0001>

<llo_original>
// kernel: discriminator_forward.1
$region0: #{discriminator_forward.1}
  #allocation0 [shape = 'u32[]', space=smem, size = 0x4, offset = 0x4, fixed_abs, tag = 'smem constant byte address 0x4 - core index']
  #allocation1 [shape = 'u32[144,128]{1,0:T(1,128)}', space=vmem, size = 0x12000, scoped, tag = 'internal scratch']
  #allocation2 [shape = 'f32[1,1]{1,0:T(1,128)S(1)}', space=vmem, size = 0x200, scoped, tag = 'scoped memory for discriminator_forward.1']
  %s0 = inlined_call_operand.vmem [shape: f32[16,784], index: 0, kind: input, shape index: {}]
  %s1 = inlined_call_operand.vmem [shape: bf16[784,512], index: 1, kind: input, shape index: {}]
  %s2 = inlined_call_operand.vmem [shape: f32[1,512], index: 2, kind: input, shape index: {}]
  %s3 = inlined_call_operand.vmem [shape: bf16[512,256], index: 3, kind: input, shape index: {}]
  %s4 = inlined_call_operand.vmem [shape: f32[1,256], index: 4, kind: input, shape index: {}]
  %s5 = inlined_call_operand.vmem [shape: f32[1,256], index: 5, kind: input, shape index: {}]
  %s6 = inlined_call_operand.<no memory space> [shape: f32[1,1], index: 6, kind: input, shape index: {}]
  %s7 = inlined_call_operand.vmem [shape: f32[16,1], index: 7, kind: output, shape index: {}]
  %s8 = sld [smem:[#allocation0]]
  $region38: #{discriminator_forward.1} parent=0
    _
  %s10 = ssub.s32 1, %s8
  %s11 = scalar_select 0, %s10, %s8
  %v12 = vstv %s6
  %13 = vst [vmem:[#allocation2] sm:$0x1] %v12
  // Predicated region
  $region2: #{discriminator_forward.1} parent=0 // pred_check
    _
  $region3: #{discriminator_forward.1} parent=0 // pred_check_branch
    %15 = sbr.rel (0) target = $region5
  $region4: #{discriminator_forward.1} parent=0 // pred_region
    _
  $region5: #{discriminator_forward.1} parent=0 // pred_fallthru
    _
  // Predicated region
  $region6: #{discriminator_forward.1} parent=0 // pred_check
    _
  $region7: #{discriminator_forward.1} parent=0 // pred_check_branch
    %17 = sbr.rel (0) target = $region9
  $region8: #{discriminator_forward.1} parent=0 // pred_region
    _
  $region9: #{discriminator_forward.1} parent=0 // pred_fallthru
    _
  // Predicated region
  $region10: #{discriminator_forward.1} parent=0 // pred_check
    _
  $region11: #{discriminator_forward.1} parent=0 // pred_check_branch
    %19 = sbr.rel (0) target = $region13
  $region12: #{discriminator_forward.1} parent=0 // pred_region
    _
  $region13: #{discriminator_forward.1} parent=0 // pred_fallthru
    _
  // Predicated region
  $region14: #{discriminator_forward.1} parent=0 // pred_check
    _
  $region15: #{discriminator_forward.1} parent=0 // pred_check_branch
    %21 = sbr.rel (0) target = $region17
  $region16: #{discriminator_forward.1} parent=0 // pred_region
    _
  $region17: #{discriminator_forward.1} parent=0 // pred_fallthru
    _
  // Predicated region
  $region18: #{discriminator_forward.1} parent=0 // pred_check
    _
  $region19: #{discriminator_forward.1} parent=0 // pred_check_branch
    %23 = sbr.rel (0) target = $region21
  $region20: #{discriminator_forward.1} parent=0 // pred_region
    _
  $region21: #{discriminator_forward.1} parent=0 // pred_fallthru
    _
  // Predicated region
  $region22: #{discriminator_forward.1} parent=0 // pred_check
    _
  $region23: #{discriminator_forward.1} parent=0 // pred_check_branch
    %25 = sbr.rel (0) target = $region25
  $region24: #{discriminator_forward.1} parent=0 // pred_region
    _
  $region25: #{discriminator_forward.1} parent=0 // pred_fallthru
    _
  // Predicated region
  $region26: #{discriminator_forward.1} parent=0 // pred_check
    _
  $region27: #{discriminator_forward.1} parent=0 // pred_check_branch
    %27 = sbr.rel (0) target = $region29
  $region28: #{discriminator_forward.1} parent=0 // pred_region
    _
  $region29: #{discriminator_forward.1} parent=0 // pred_fallthru
    _
  %v29 = vld [vmem:[%s0] sm:$0xff]
  %v30 = vld [vmem:[%s0 + $0x8] sm:$0xff]
  %v31 = vld [vmem:[%s0 + $0x10] sm:$0xff]
  %v32 = vld [vmem:[%s0 + $0x18] sm:$0xff]
  %v33 = vld [vmem:[%s0 + $0x20] sm:$0xff]
  %v34 = vld [vmem:[%s0 + $0x28] sm:$0xff]
  %v35 = vld [vmem:[%s0 + $0x30] sm:$0xff]
  %v36 = vld [vmem:[%s0 + $0x38] sm:$0xff]
  %v37 = vld [vmem:[%s0 + $0x40] sm:$0xff]
  %v38 = vld [vmem:[%s0 + $0x48] sm:$0xff]
  %v39 = vld [vmem:[%s0 + $0x50] sm:$0xff]
  %v40 = vld [vmem:[%s0 + $0x58] sm:$0xff]
  %v41 = vld [vmem:[%s0 + $0x60] sm:$0xff]
  %v42 = vld [vmem:[%s0 + $0x68] sm:$0xff]
  %v43 = vpack.c.bf16 %v36, %v29
  %v44 = vpack.c.bf16 %v37, %v30
  %v45 = vpack.c.bf16 %v38, %v31
  %v46 = vpack.c.bf16 %v39, %v32
  %v47 = vpack.c.bf16 %v40, %v33
  %v48 = vpack.c.bf16 %v41, %v34
  %v49 = vpack.c.bf16 %v42, %v35
  %v50 = vld [vmem:[%s1] sm:$0xff]
  %v51 = vld [vmem:[%s1 + $0x8] sm:$0xff]
  %v52 = vld [vmem:[%s1 + $0x10] sm:$0xff]
  %v53 = vld [vmem:[%s1 + $0x18] sm:$0xff]
  %v54 = vld [vmem:[%s1 + $0x20] sm:$0xff]
  %v55 = vld [vmem:[%s1 + $0x28] sm:$0xff]
  %v56 = vld [vmem:[%s1 + $0x30] sm:$0xff]
  %v57 = vld [vmem:[%s1 + $0x38] sm:$0xff]
  %v58 = vld [vmem:[%s1 + $0x40] sm:$0xff]
  %v59 = vld [vmem:[%s1 + $0x48] sm:$0xff]
  %v60 = vld [vmem:[%s1 + $0x50] sm:$0xff]
  %v61 = vld [vmem:[%s1 + $0x58] sm:$0xff]
  %v62 = vld [vmem:[%s1 + $0x60] sm:$0xff]
  %v63 = vld [vmem:[%s1 + $0x68] sm:$0xff]
  %v64 = vld [vmem:[%s1 + $0x70] sm:$0xff]
  %v65 = vld [vmem:[%s1 + $0x78] sm:$0xff]
  %v66 = vld [vmem:[%s1 + $0x80] sm:$0xff]
  %v67 = vld [vmem:[%s1 + $0x88] sm:$0xff]
  %v68 = vld [vmem:[%s1 + $0x90] sm:$0xff]
  %v69 = vld [vmem:[%s1 + $0x98] sm:$0xff]
  %v70 = vld [vmem:[%s1 + $0xa0] sm:$0xff]
  %v71 = vld [vmem:[%s1 + $0xa8] sm:$0xff]
  %v72 = vld [vmem:[%s1 + $0xb0] sm:$0xff]
  %v73 = vld [vmem:[%s1 + $0xb8] sm:$0xff]
  %v74 = vld [vmem:[%s1 + $0xc0] sm:$0xff]
  %v75 = vld [vmem:[%s1 + $0xc8] sm:$0xff]
  %v76 = vld [vmem:[%s1 + $0xd0] sm:$0xff]
  %v77 = vld [vmem:[%s1 + $0xd8] sm:$0xff]
  %v78 = vld [vmem:[%s1 + $0xe0] sm:$0xff]
  %v79 = vld [vmem:[%s1 + $0xe8] sm:$0xff]
  %v80 = vld [vmem:[%s1 + $0xf0] sm:$0xff]
  %v81 = vld [vmem:[%s1 + $0xf8] sm:$0xff]
  %v82 = vld [vmem:[%s1 + $0x100] sm:$0xff]
  %v83 = vld [vmem:[%s1 + $0x108] sm:$0xff]
  %v84 = vld [vmem:[%s1 + $0x110] sm:$0xff]
  %v85 = vld [vmem:[%s1 + $0x118] sm:$0xff]
  %v86 = vld [vmem:[%s1 + $0x120] sm:$0xff]
  %v87 = vld [vmem:[%s1 + $0x128] sm:$0xff]
  %v88 = vld [vmem:[%s1 + $0x130] sm:$0xff]
  %v89 = vld [vmem:[%s1 + $0x138] sm:$0xff]
  %v90 = vld [vmem:[%s1 + $0x140] sm:$0xff]
  %v91 = vld [vmem:[%s1 + $0x148] sm:$0xff]
  %v92 = vld [vmem:[%s1 + $0x150] sm:$0xff]
  %v93 = vld [vmem:[%s1 + $0x158] sm:$0xff]
  %v94 = vld [vmem:[%s1 + $0x160] sm:$0xff]
  %v95 = vld [vmem:[%s1 + $0x168] sm:$0xff]
  %v96 = vld [vmem:[%s1 + $0x170] sm:$0xff]
  %v97 = vld [vmem:[%s1 + $0x178] sm:$0xff]
  %v98 = vld [vmem:[%s1 + $0x180] sm:$0xff]
  %v99 = vld [vmem:[%s1 + $0x188] sm:$0xff]
  %v100 = vld [vmem:[%s1 + $0x190] sm:$0xff]
  %v101 = vld [vmem:[%s1 + $0x198] sm:$0xff]
  %v102 = vld [vmem:[%s1 + $0x1a0] sm:$0xff]
  %v103 = vld [vmem:[%s1 + $0x1a8] sm:$0xff]
  %v104 = vld [vmem:[%s1 + $0x1b0] sm:$0xff]
  %v105 = vld [vmem:[%s1 + $0x1b8] sm:$0xff]
  %v106 = vld [vmem:[%s1 + $0x1c0] sm:$0xff]
  %v107 = vld [vmem:[%s1 + $0x1c8] sm:$0xff]
  %v108 = vld [vmem:[%s1 + $0x1d0] sm:$0xff]
  %v109 = vld [vmem:[%s1 + $0x1d8] sm:$0xff]
  %v110 = vld [vmem:[%s1 + $0x1e0] sm:$0xff]
  %v111 = vld [vmem:[%s1 + $0x1e8] sm:$0xff]
  %v112 = vld [vmem:[%s1 + $0x1f0] sm:$0xff]
  %v113 = vld [vmem:[%s1 + $0x1f8] sm:$0xff]
  %v114 = vld [vmem:[%s1 + $0x200] sm:$0xff]
  %v115 = vld [vmem:[%s1 + $0x208] sm:$0xff]
  %v116 = vld [vmem:[%s1 + $0x210] sm:$0xff]
  %v117 = vld [vmem:[%s1 + $0x218] sm:$0xff]
  %v118 = vld [vmem:[%s1 + $0x220] sm:$0xff]
  %v119 = vld [vmem:[%s1 + $0x228] sm:$0xff]
  %v120 = vld [vmem:[%s1 + $0x230] sm:$0xff]
  %v121 = vld [vmem:[%s1 + $0x238] sm:$0xff]
  %v122 = vld [vmem:[%s1 + $0x240] sm:$0xff]
  %v123 = vld [vmem:[%s1 + $0x248] sm:$0xff]
  %v124 = vld [vmem:[%s1 + $0x250] sm:$0xff]
  %v125 = vld [vmem:[%s1 + $0x258] sm:$0xff]
  %v126 = vld [vmem:[%s1 + $0x260] sm:$0xff]
  %v127 = vld [vmem:[%s1 + $0x268] sm:$0xff]
  %v128 = vld [vmem:[%s1 + $0x270] sm:$0xff]
  %v129 = vld [vmem:[%s1 + $0x278] sm:$0xff]
  %v130 = vld [vmem:[%s1 + $0x280] sm:$0xff]
  %v131 = vld [vmem:[%s1 + $0x288] sm:$0xff]
  %v132 = vld [vmem:[%s1 + $0x290] sm:$0xff]
  %v133 = vld [vmem:[%s1 + $0x298] sm:$0xff]
  %v134 = vld [vmem:[%s1 + $0x2a0] sm:$0xff]
  %v135 = vld [vmem:[%s1 + $0x2a8] sm:$0xff]
  %v136 = vld [vmem:[%s1 + $0x2b0] sm:$0xff]
  %v137 = vld [vmem:[%s1 + $0x2b8] sm:$0xff]
  %v138 = vld [vmem:[%s1 + $0x2c0] sm:$0xff]
  %v139 = vld [vmem:[%s1 + $0x2c8] sm:$0xff]
  %v140 = vld [vmem:[%s1 + $0x2d0] sm:$0xff]
  %v141 = vld [vmem:[%s1 + $0x2d8] sm:$0xff]
  %v142 = vld [vmem:[%s1 + $0x2e0] sm:$0xff]
  %v143 = vld [vmem:[%s1 + $0x2e8] sm:$0xff]
  %v144 = vld [vmem:[%s1 + $0x2f0] sm:$0xff]
  %v145 = vld [vmem:[%s1 + $0x2f8] sm:$0xff]
  %v146 = vld [vmem:[%s1 + $0x300] sm:$0xff]
  %v147 = vld [vmem:[%s1 + $0x308] sm:$0xff]
  %v148 = vld [vmem:[%s1 + $0x310] sm:$0xff]
  %v149 = vld [vmem:[%s1 + $0x318] sm:$0xff]
  %v150 = vld [vmem:[%s1 + $0x320] sm:$0xff]
  %v151 = vld [vmem:[%s1 + $0x328] sm:$0xff]
  %v152 = vld [vmem:[%s1 + $0x330] sm:$0xff]
  %v153 = vld [vmem:[%s1 + $0x338] sm:$0xff]
  %v154 = vld [vmem:[%s1 + $0x340] sm:$0xff]
  %v155 = vld [vmem:[%s1 + $0x348] sm:$0xff]
  %v156 = vld [vmem:[%s1 + $0x350] sm:$0xff]
  %v157 = vld [vmem:[%s1 + $0x358] sm:$0xff]
  %v158 = vld [vmem:[%s1 + $0x360] sm:$0xff]
  %v159 = vld [vmem:[%s1 + $0x368] sm:$0xff]
  %v160 = vld [vmem:[%s1 + $0x370] sm:$0xff]
  %v161 = vld [vmem:[%s1 + $0x378] sm:$0xff]
  %v162 = vld [vmem:[%s1 + $0x380] sm:$0xff]
  %v163 = vld [vmem:[%s1 + $0x388] sm:$0xff]
  %v164 = vld [vmem:[%s1 + $0x390] sm:$0xff]
  %v165 = vld [vmem:[%s1 + $0x398] sm:$0xff]
  %v166 = vld [vmem:[%s1 + $0x3a0] sm:$0xff]
  %v167 = vld [vmem:[%s1 + $0x3a8] sm:$0xff]
  %v168 = vld [vmem:[%s1 + $0x3b0] sm:$0xff]
  %v169 = vld [vmem:[%s1 + $0x3b8] sm:$0xff]
  %v170 = vld [vmem:[%s1 + $0x3c0] sm:$0xff]
  %v171 = vld [vmem:[%s1 + $0x3c8] sm:$0xff]
  %v172 = vld [vmem:[%s1 + $0x3d0] sm:$0xff]
  %v173 = vld [vmem:[%s1 + $0x3d8] sm:$0xff]
  %v174 = vld [vmem:[%s1 + $0x3e0] sm:$0xff]
  %v175 = vld [vmem:[%s1 + $0x3e8] sm:$0xff]
  %v176 = vld [vmem:[%s1 + $0x3f0] sm:$0xff]
  %v177 = vld [vmem:[%s1 + $0x3f8] sm:$0xff]
  %v178 = vld [vmem:[%s1 + $0x400] sm:$0xff]
  %v179 = vld [vmem:[%s1 + $0x408] sm:$0xff]
  %v180 = vld [vmem:[%s1 + $0x410] sm:$0xff]
  %v181 = vld [vmem:[%s1 + $0x418] sm:$0xff]
  %v182 = vld [vmem:[%s1 + $0x420] sm:$0xff]
  %v183 = vld [vmem:[%s1 + $0x428] sm:$0xff]
  %v184 = vld [vmem:[%s1 + $0x430] sm:$0xff]
  %v185 = vld [vmem:[%s1 + $0x438] sm:$0xff]
  %v186 = vld [vmem:[%s1 + $0x440] sm:$0xff]
  %v187 = vld [vmem:[%s1 + $0x448] sm:$0xff]
  %v188 = vld [vmem:[%s1 + $0x450] sm:$0xff]
  %v189 = vld [vmem:[%s1 + $0x458] sm:$0xff]
  %v190 = vld [vmem:[%s1 + $0x460] sm:$0xff]
  %v191 = vld [vmem:[%s1 + $0x468] sm:$0xff]
  %v192 = vld [vmem:[%s1 + $0x470] sm:$0xff]
  %v193 = vld [vmem:[%s1 + $0x478] sm:$0xff]
  %v194 = vld [vmem:[%s1 + $0x480] sm:$0xff]
  %v195 = vld [vmem:[%s1 + $0x488] sm:$0xff]
  %v196 = vld [vmem:[%s1 + $0x490] sm:$0xff]
  %v197 = vld [vmem:[%s1 + $0x498] sm:$0xff]
  %v198 = vld [vmem:[%s1 + $0x4a0] sm:$0xff]
  %v199 = vld [vmem:[%s1 + $0x4a8] sm:$0xff]
  %v200 = vld [vmem:[%s1 + $0x4b0] sm:$0xff]
  %v201 = vld [vmem:[%s1 + $0x4b8] sm:$0xff]
  %v202 = vld [vmem:[%s1 + $0x4c0] sm:$0xff]
  %v203 = vld [vmem:[%s1 + $0x4c8] sm:$0xff]
  %v204 = vld [vmem:[%s1 + $0x4d0] sm:$0xff]
  %v205 = vld [vmem:[%s1 + $0x4d8] sm:$0xff]
  %v206 = vld [vmem:[%s1 + $0x4e0] sm:$0xff]
  %v207 = vld [vmem:[%s1 + $0x4e8] sm:$0xff]
  %v208 = vld [vmem:[%s1 + $0x4f0] sm:$0xff]
  %v209 = vld [vmem:[%s1 + $0x4f8] sm:$0xff]
  %v210 = vld [vmem:[%s1 + $0x500] sm:$0xff]
  %v211 = vld [vmem:[%s1 + $0x508] sm:$0xff]
  %v212 = vld [vmem:[%s1 + $0x510] sm:$0xff]
  %v213 = vld [vmem:[%s1 + $0x518] sm:$0xff]
  %v214 = vld [vmem:[%s1 + $0x520] sm:$0xff]
  %v215 = vld [vmem:[%s1 + $0x528] sm:$0xff]
  %v216 = vld [vmem:[%s1 + $0x530] sm:$0xff]
  %v217 = vld [vmem:[%s1 + $0x538] sm:$0xff]
  %v218 = vld [vmem:[%s1 + $0x540] sm:$0xff]
  %v219 = vld [vmem:[%s1 + $0x548] sm:$0xff]
  %v220 = vld [vmem:[%s1 + $0x550] sm:$0xff]
  %v221 = vld [vmem:[%s1 + $0x558] sm:$0xff]
  %v222 = vld [vmem:[%s1 + $0x560] sm:$0xff]
  %v223 = vld [vmem:[%s1 + $0x568] sm:$0xff]
  %v224 = vld [vmem:[%s1 + $0x570] sm:$0xff]
  %v225 = vld [vmem:[%s1 + $0x578] sm:$0xff]
  %v226 = vld [vmem:[%s1 + $0x580] sm:$0xff]
  %v227 = vld [vmem:[%s1 + $0x588] sm:$0xff]
  %v228 = vld [vmem:[%s1 + $0x590] sm:$0xff]
  %v229 = vld [vmem:[%s1 + $0x598] sm:$0xff]
  %v230 = vld [vmem:[%s1 + $0x5a0] sm:$0xff]
  %v231 = vld [vmem:[%s1 + $0x5a8] sm:$0xff]
  %v232 = vld [vmem:[%s1 + $0x5b0] sm:$0xff]
  %v233 = vld [vmem:[%s1 + $0x5b8] sm:$0xff]
  %v234 = vld [vmem:[%s1 + $0x5c0] sm:$0xff]
  %v235 = vld [vmem:[%s1 + $0x5c8] sm:$0xff]
  %v236 = vld [vmem:[%s1 + $0x5d0] sm:$0xff]
  %v237 = vld [vmem:[%s1 + $0x5d8] sm:$0xff]
  %v238 = vld [vmem:[%s1 + $0x5e0] sm:$0xff]
  %v239 = vld [vmem:[%s1 + $0x5e8] sm:$0xff]
  %v240 = vld [vmem:[%s1 + $0x5f0] sm:$0xff]
  %v241 = vld [vmem:[%s1 + $0x5f8] sm:$0xff]
  %v242 = vld [vmem:[%s1 + $0x600] sm:$0xff]
  %v243 = vld [vmem:[%s1 + $0x608] sm:$0xff]
  %v244 = vld [vmem:[%s1 + $0x610] sm:$0xff]
  %v245 = vld [vmem:[%s1 + $0x618] sm:$0xff]
  %v246 = vld [vmem:[%s2] sm:$0xf]
  %v248 = vlaneseq
  %v249 = vshrl.u32 %v248, 7
  %v250 = vsub.s32 0, %v249
  %v251 = vrot.slane %v246, %v250
  %v252 = vlaneseq
  %v253 = vshrl.u32 %v252, 7
  %v254 = vsub.s32 1, %v253
  %v255 = vrot.slane %v246, %v254
  %v256 = vlaneseq
  %v257 = vshrl.u32 %v256, 7
  %v258 = vsub.s32 2, %v257
  %v259 = vrot.slane %v246, %v258
  %v260 = vlaneseq
  %v261 = vshrl.u32 %v260, 7
  %v262 = vsub.s32 3, %v261
  %v263 = vrot.slane %v246, %v262
  %v464 = vunpack.c.l.b16 %v50
  %v465 = vunpack.c.h.b16 %v50
  %v466 = vunpack.c.l.b16 %v51
  %v467 = vunpack.c.h.b16 %v51
  %v468 = vunpack.c.l.b16 %v52
  %v469 = vunpack.c.h.b16 %v52
  %v470 = vunpack.c.l.b16 %v53
  %v471 = vunpack.c.h.b16 %v53
  %v472 = vunpack.c.l.b16 %v54
  %v473 = vunpack.c.h.b16 %v54
  %v474 = vunpack.c.l.b16 %v55
  %v475 = vunpack.c.h.b16 %v55
  %v476 = vunpack.c.l.b16 %v56
  %v477 = vunpack.c.h.b16 %v56
  %v478 = vunpack.c.l.b16 %v57
  %v479 = vunpack.c.h.b16 %v57
  %v480 = vunpack.c.l.b16 %v58
  %v481 = vunpack.c.h.b16 %v58
  %v482 = vunpack.c.l.b16 %v59
  %v483 = vunpack.c.h.b16 %v59
  %v484 = vunpack.c.l.b16 %v60
  %v485 = vunpack.c.h.b16 %v60
  %v486 = vunpack.c.l.b16 %v61
  %v487 = vunpack.c.h.b16 %v61
  %v488 = vunpack.c.l.b16 %v62
  %v489 = vunpack.c.h.b16 %v62
  %v490 = vunpack.c.l.b16 %v63
  %v491 = vunpack.c.h.b16 %v63
  %v492 = vunpack.c.l.b16 %v64
  %v493 = vunpack.c.h.b16 %v64
  %v494 = vunpack.c.l.b16 %v65
  %v495 = vunpack.c.h.b16 %v65
  %v496 = vunpack.c.l.b16 %v66
  %v497 = vunpack.c.h.b16 %v66
  %v498 = vunpack.c.l.b16 %v67
  %v499 = vunpack.c.h.b16 %v67
  %v500 = vunpack.c.l.b16 %v68
  %v501 = vunpack.c.h.b16 %v68
  %v502 = vunpack.c.l.b16 %v69
  %v503 = vunpack.c.h.b16 %v69
  %v504 = vunpack.c.l.b16 %v70
  %v505 = vunpack.c.h.b16 %v70
  %v506 = vunpack.c.l.b16 %v71
  %v507 = vunpack.c.h.b16 %v71
  %v508 = vunpack.c.l.b16 %v72
  %v509 = vunpack.c.h.b16 %v72
  %v510 = vunpack.c.l.b16 %v73
  %v511 = vunpack.c.h.b16 %v73
  %v512 = vunpack.c.l.b16 %v74
  %v513 = vunpack.c.h.b16 %v74
  %v514 = vunpack.c.l.b16 %v75
  %v515 = vunpack.c.h.b16 %v75
  %v516 = vunpack.c.l.b16 %v76
  %v517 = vunpack.c.h.b16 %v76
  %v518 = vunpack.c.l.b16 %v77
  %v519 = vunpack.c.h.b16 %v77
  %v520 = vunpack.c.l.b16 %v78
  %v521 = vunpack.c.h.b16 %v78
  %v522 = vunpack.c.l.b16 %v79
  %v523 = vunpack.c.h.b16 %v79
  %v524 = vunpack.c.l.b16 %v80
  %v525 = vunpack.c.h.b16 %v80
  %v526 = vunpack.c.l.b16 %v81
  %v527 = vunpack.c.h.b16 %v81
  %v528 = vunpack.c.l.b16 %v82
  %v529 = vunpack.c.h.b16 %v82
  %v530 = vunpack.c.l.b16 %v83
  %v531 = vunpack.c.h.b16 %v83
  %v532 = vunpack.c.l.b16 %v84
  %v533 = vunpack.c.h.b16 %v84
  %v534 = vunpack.c.l.b16 %v85
  %v535 = vunpack.c.h.b16 %v85
  %v536 = vunpack.c.l.b16 %v86
  %v537 = vunpack.c.h.b16 %v86
  %v538 = vunpack.c.l.b16 %v87
  %v539 = vunpack.c.h.b16 %v87
  %v540 = vunpack.c.l.b16 %v88
  %v541 = vunpack.c.h.b16 %v88
  %v542 = vunpack.c.l.b16 %v89
  %v543 = vunpack.c.h.b16 %v89
  %v544 = vunpack.c.l.b16 %v90
  %v545 = vunpack.c.h.b16 %v90
  %v546 = vunpack.c.l.b16 %v91
  %v547 = vunpack.c.h.b16 %v91
  %v548 = vunpack.c.l.b16 %v92
  %v549 = vunpack.c.h.b16 %v92
  %v550 = vunpack.c.l.b16 %v93
  %v551 = vunpack.c.h.b16 %v93
  %v552 = vunpack.c.l.b16 %v94
  %v553 = vunpack.c.h.b16 %v94
  %v554 = vunpack.c.l.b16 %v95
  %v555 = vunpack.c.h.b16 %v95
  %v556 = vunpack.c.l.b16 %v96
  %v557 = vunpack.c.h.b16 %v96
  %v558 = vunpack.c.l.b16 %v97
  %v559 = vunpack.c.h.b16 %v97
  %v560 = vunpack.c.l.b16 %v98
  %v561 = vunpack.c.h.b16 %v98
  %v562 = vunpack.c.l.b16 %v99
  %v563 = vunpack.c.h.b16 %v99
  %v564 = vunpack.c.l.b16 %v100
  %v565 = vunpack.c.h.b16 %v100
  %v566 = vunpack.c.l.b16 %v101
  %v567 = vunpack.c.h.b16 %v101
  %v568 = vunpack.c.l.b16 %v102
  %v569 = vunpack.c.h.b16 %v102
  %v570 = vunpack.c.l.b16 %v103
  %v571 = vunpack.c.h.b16 %v103
  %v572 = vunpack.c.l.b16 %v104
  %v573 = vunpack.c.h.b16 %v104
  %v574 = vunpack.c.l.b16 %v105
  %v575 = vunpack.c.h.b16 %v105
  %v576 = vunpack.c.l.b16 %v106
  %v577 = vunpack.c.h.b16 %v106
  %v578 = vunpack.c.l.b16 %v107
  %v579 = vunpack.c.h.b16 %v107
  %v580 = vunpack.c.l.b16 %v108
  %v581 = vunpack.c.h.b16 %v108
  %v582 = vunpack.c.l.b16 %v109
  %v583 = vunpack.c.h.b16 %v109
  %v584 = vunpack.c.l.b16 %v110
  %v585 = vunpack.c.h.b16 %v110
  %v586 = vunpack.c.l.b16 %v111
  %v587 = vunpack.c.h.b16 %v111
  %v588 = vunpack.c.l.b16 %v112
  %v589 = vunpack.c.h.b16 %v112
  %v590 = vunpack.c.l.b16 %v113
  %v591 = vunpack.c.h.b16 %v113
  %v592 = vunpack.c.l.b16 %v114
  %v593 = vunpack.c.h.b16 %v114
  %v594 = vunpack.c.l.b16 %v115
  %v595 = vunpack.c.h.b16 %v115
  %v596 = vunpack.c.l.b16 %v116
  %v597 = vunpack.c.h.b16 %v116
  %v598 = vunpack.c.l.b16 %v117
  %v599 = vunpack.c.h.b16 %v117
  %v600 = vunpack.c.l.b16 %v118
  %v601 = vunpack.c.h.b16 %v118
  %v602 = vunpack.c.l.b16 %v119
  %v603 = vunpack.c.h.b16 %v119
  %v604 = vunpack.c.l.b16 %v120
  %v605 = vunpack.c.h.b16 %v120
  %v606 = vunpack.c.l.b16 %v121
  %v607 = vunpack.c.h.b16 %v121
  %v608 = vunpack.c.l.b16 %v122
  %v609 = vunpack.c.h.b16 %v122
  %v610 = vunpack.c.l.b16 %v123
  %v611 = vunpack.c.h.b16 %v123
  %v612 = vunpack.c.l.b16 %v124
  %v613 = vunpack.c.h.b16 %v124
  %v614 = vunpack.c.l.b16 %v125
  %v615 = vunpack.c.h.b16 %v125
  %v616 = vunpack.c.l.b16 %v126
  %v617 = vunpack.c.h.b16 %v126
  %v618 = vunpack.c.l.b16 %v127
  %v619 = vunpack.c.h.b16 %v127
  %v620 = vunpack.c.l.b16 %v128
  %v621 = vunpack.c.h.b16 %v128
  %v622 = vunpack.c.l.b16 %v129
  %v623 = vunpack.c.h.b16 %v129
  %v624 = vunpack.c.l.b16 %v130
  %v625 = vunpack.c.h.b16 %v130
  %v626 = vunpack.c.l.b16 %v131
  %v627 = vunpack.c.h.b16 %v131
  %v628 = vunpack.c.l.b16 %v132
  %v629 = vunpack.c.h.b16 %v132
  %v630 = vunpack.c.l.b16 %v133
  %v631 = vunpack.c.h.b16 %v133
  %v632 = vunpack.c.l.b16 %v134
  %v633 = vunpack.c.h.b16 %v134
  %v634 = vunpack.c.l.b16 %v135
  %v635 = vunpack.c.h.b16 %v135
  %v636 = vunpack.c.l.b16 %v136
  %v637 = vunpack.c.h.b16 %v136
  %v638 = vunpack.c.l.b16 %v137
  %v639 = vunpack.c.h.b16 %v137
  %v640 = vunpack.c.l.b16 %v138
  %v641 = vunpack.c.h.b16 %v138
  %v642 = vunpack.c.l.b16 %v139
  %v643 = vunpack.c.h.b16 %v139
  %v644 = vunpack.c.l.b16 %v140
  %v645 = vunpack.c.h.b16 %v140
  %v646 = vunpack.c.l.b16 %v141
  %v647 = vunpack.c.h.b16 %v141
  %v648 = vunpack.c.l.b16 %v142
  %v649 = vunpack.c.h.b16 %v142
  %v650 = vunpack.c.l.b16 %v143
  %v651 = vunpack.c.h.b16 %v143
  %v652 = vunpack.c.l.b16 %v144
  %v653 = vunpack.c.h.b16 %v144
  %v654 = vunpack.c.l.b16 %v145
  %v655 = vunpack.c.h.b16 %v145
  %v656 = vunpack.c.l.b16 %v146
  %v657 = vunpack.c.h.b16 %v146
  %v658 = vunpack.c.l.b16 %v147
  %v659 = vunpack.c.h.b16 %v147
  %v660 = vunpack.c.l.b16 %v148
  %v661 = vunpack.c.h.b16 %v148
  %v662 = vunpack.c.l.b16 %v149
  %v663 = vunpack.c.h.b16 %v149
  %v664 = vunpack.c.l.b16 %v150
  %v665 = vunpack.c.h.b16 %v150
  %v666 = vunpack.c.l.b16 %v151
  %v667 = vunpack.c.h.b16 %v151
  %v668 = vunpack.c.l.b16 %v152
  %v669 = vunpack.c.h.b16 %v152
  %v670 = vunpack.c.l.b16 %v153
  %v671 = vunpack.c.h.b16 %v153
  %v672 = vunpack.c.l.b16 %v154
  %v673 = vunpack.c.h.b16 %v154
  %v674 = vunpack.c.l.b16 %v155
  %v675 = vunpack.c.h.b16 %v155
  %v676 = vunpack.c.l.b16 %v156
  %v677 = vunpack.c.h.b16 %v156
  %v678 = vunpack.c.l.b16 %v157
  %v679 = vunpack.c.h.b16 %v157
  %v680 = vunpack.c.l.b16 %v158
  %v681 = vunpack.c.h.b16 %v158
  %v682 = vunpack.c.l.b16 %v159
  %v683 = vunpack.c.h.b16 %v159
  %v684 = vunpack.c.l.b16 %v160
  %v685 = vunpack.c.h.b16 %v160
  %v686 = vunpack.c.l.b16 %v161
  %v687 = vunpack.c.h.b16 %v161
  %v688 = vunpack.c.l.b16 %v162
  %v689 = vunpack.c.h.b16 %v162
  %v690 = vunpack.c.l.b16 %v163
  %v691 = vunpack.c.h.b16 %v163
  %v692 = vunpack.c.l.b16 %v164
  %v693 = vunpack.c.h.b16 %v164
  %v694 = vunpack.c.l.b16 %v165
  %v695 = vunpack.c.h.b16 %v165
  %v696 = vunpack.c.l.b16 %v166
  %v697 = vunpack.c.h.b16 %v166
  %v698 = vunpack.c.l.b16 %v167
  %v699 = vunpack.c.h.b16 %v167
  %v700 = vunpack.c.l.b16 %v168
  %v701 = vunpack.c.h.b16 %v168
  %v702 = vunpack.c.l.b16 %v169
  %v703 = vunpack.c.h.b16 %v169
  %v704 = vunpack.c.l.b16 %v170
  %v705 = vunpack.c.h.b16 %v170
  %v706 = vunpack.c.l.b16 %v171
  %v707 = vunpack.c.h.b16 %v171
  %v708 = vunpack.c.l.b16 %v172
  %v709 = vunpack.c.h.b16 %v172
  %v710 = vunpack.c.l.b16 %v173
  %v711 = vunpack.c.h.b16 %v173
  %v712 = vunpack.c.l.b16 %v174
  %v713 = vunpack.c.h.b16 %v174
  %v714 = vunpack.c.l.b16 %v175
  %v715 = vunpack.c.h.b16 %v175
  %v716 = vunpack.c.l.b16 %v176
  %v717 = vunpack.c.h.b16 %v176
  %v718 = vunpack.c.l.b16 %v177
  %v719 = vunpack.c.h.b16 %v177
  %v720 = vunpack.c.l.b16 %v178
  %v721 = vunpack.c.h.b16 %v178
  %v722 = vunpack.c.l.b16 %v179
  %v723 = vunpack.c.h.b16 %v179
  %v724 = vunpack.c.l.b16 %v180
  %v725 = vunpack.c.h.b16 %v180
  %v726 = vunpack.c.l.b16 %v181
  %v727 = vunpack.c.h.b16 %v181
  %v728 = vunpack.c.l.b16 %v182
  %v729 = vunpack.c.h.b16 %v182
  %v730 = vunpack.c.l.b16 %v183
  %v731 = vunpack.c.h.b16 %v183
  %v732 = vunpack.c.l.b16 %v184
  %v733 = vunpack.c.h.b16 %v184
  %v734 = vunpack.c.l.b16 %v185
  %v735 = vunpack.c.h.b16 %v185
  %v736 = vunpack.c.l.b16 %v186
  %v737 = vunpack.c.h.b16 %v186
  %v738 = vunpack.c.l.b16 %v187
  %v739 = vunpack.c.h.b16 %v187
  %v740 = vunpack.c.l.b16 %v188
  %v741 = vunpack.c.h.b16 %v188
  %v742 = vunpack.c.l.b16 %v189
  %v743 = vunpack.c.h.b16 %v189
  %v744 = vunpack.c.l.b16 %v190
  %v745 = vunpack.c.h.b16 %v190
  %v746 = vunpack.c.l.b16 %v191
  %v747 = vunpack.c.h.b16 %v191
  %v748 = vunpack.c.l.b16 %v192
  %v749 = vunpack.c.h.b16 %v192
  %v750 = vunpack.c.l.b16 %v193
  %v751 = vunpack.c.h.b16 %v193
  %v752 = vunpack.c.l.b16 %v194
  %v753 = vunpack.c.h.b16 %v194
  %v754 = vunpack.c.l.b16 %v195
  %v755 = vunpack.c.h.b16 %v195
  %v756 = vunpack.c.l.b16 %v196
  %v757 = vunpack.c.h.b16 %v196
  %v758 = vunpack.c.l.b16 %v197
  %v759 = vunpack.c.h.b16 %v197
  %v760 = vunpack.c.l.b16 %v198
  %v761 = vunpack.c.h.b16 %v198
  %v762 = vunpack.c.l.b16 %v199
  %v763 = vunpack.c.h.b16 %v199
  %v764 = vunpack.c.l.b16 %v200
  %v765 = vunpack.c.h.b16 %v200
  %v766 = vunpack.c.l.b16 %v201
  %v767 = vunpack.c.h.b16 %v201
  %v768 = vunpack.c.l.b16 %v202
  %v769 = vunpack.c.h.b16 %v202
  %v770 = vunpack.c.l.b16 %v203
  %v771 = vunpack.c.h.b16 %v203
  %v772 = vunpack.c.l.b16 %v204
  %v773 = vunpack.c.h.b16 %v204
  %v774 = vunpack.c.l.b16 %v205
  %v775 = vunpack.c.h.b16 %v205
  %v776 = vunpack.c.l.b16 %v206
  %v777 = vunpack.c.h.b16 %v206
  %v778 = vunpack.c.l.b16 %v207
  %v779 = vunpack.c.h.b16 %v207
  %v780 = vunpack.c.l.b16 %v208
  %v781 = vunpack.c.h.b16 %v208
  %v782 = vunpack.c.l.b16 %v209
  %v783 = vunpack.c.h.b16 %v209
  %v784 = vunpack.c.l.b16 %v210
  %v785 = vunpack.c.h.b16 %v210
  %v786 = vunpack.c.l.b16 %v211
  %v787 = vunpack.c.h.b16 %v211
  %v788 = vunpack.c.l.b16 %v212
  %v789 = vunpack.c.h.b16 %v212
  %v790 = vunpack.c.l.b16 %v213
  %v791 = vunpack.c.h.b16 %v213
  %v792 = vunpack.c.l.b16 %v214
  %v793 = vunpack.c.h.b16 %v214
  %v794 = vunpack.c.l.b16 %v215
  %v795 = vunpack.c.h.b16 %v215
  %v796 = vunpack.c.l.b16 %v216
  %v797 = vunpack.c.h.b16 %v216
  %v798 = vunpack.c.l.b16 %v217
  %v799 = vunpack.c.h.b16 %v217
  %v800 = vunpack.c.l.b16 %v218
  %v801 = vunpack.c.h.b16 %v218
  %v802 = vunpack.c.l.b16 %v219
  %v803 = vunpack.c.h.b16 %v219
  %v804 = vunpack.c.l.b16 %v220
  %v805 = vunpack.c.h.b16 %v220
  %v806 = vunpack.c.l.b16 %v221
  %v807 = vunpack.c.h.b16 %v221
  %v808 = vunpack.c.l.b16 %v222
  %v809 = vunpack.c.h.b16 %v222
  %v810 = vunpack.c.l.b16 %v223
  %v811 = vunpack.c.h.b16 %v223
  %v812 = vunpack.c.l.b16 %v224
  %v813 = vunpack.c.h.b16 %v224
  %v814 = vunpack.c.l.b16 %v225
  %v815 = vunpack.c.h.b16 %v225
  %v816 = vunpack.c.l.b16 %v226
  %v817 = vunpack.c.h.b16 %v226
  %v818 = vunpack.c.l.b16 %v227
  %v819 = vunpack.c.h.b16 %v227
  %v820 = vunpack.c.l.b16 %v228
  %v821 = vunpack.c.h.b16 %v228
  %v822 = vunpack.c.l.b16 %v229
  %v823 = vunpack.c.h.b16 %v229
  %v824 = vunpack.c.l.b16 %v230
  %v825 = vunpack.c.h.b16 %v230
  %v826 = vunpack.c.l.b16 %v231
  %v827 = vunpack.c.h.b16 %v231
  %v828 = vunpack.c.l.b16 %v232
  %v829 = vunpack.c.h.b16 %v232
  %v830 = vunpack.c.l.b16 %v233
  %v831 = vunpack.c.h.b16 %v233
  %v832 = vunpack.c.l.b16 %v234
  %v833 = vunpack.c.h.b16 %v234
  %v834 = vunpack.c.l.b16 %v235
  %v835 = vunpack.c.h.b16 %v235
  %v836 = vunpack.c.l.b16 %v236
  %v837 = vunpack.c.h.b16 %v236
  %v838 = vunpack.c.l.b16 %v237
  %v839 = vunpack.c.h.b16 %v237
  %v840 = vunpack.c.l.b16 %v238
  %v841 = vunpack.c.h.b16 %v238
  %v842 = vunpack.c.l.b16 %v239
  %v843 = vunpack.c.h.b16 %v239
  %v844 = vunpack.c.l.b16 %v240
  %v845 = vunpack.c.h.b16 %v240
  %v846 = vunpack.c.l.b16 %v241
  %v847 = vunpack.c.h.b16 %v241
  %v848 = vunpack.c.l.b16 %v242
  %v849 = vunpack.c.h.b16 %v242
  %v850 = vunpack.c.l.b16 %v243
  %v851 = vunpack.c.h.b16 %v243
  %v852 = vunpack.c.l.b16 %v244
  %v853 = vunpack.c.h.b16 %v244
  %v854 = vunpack.c.l.b16 %v245
  %v855 = vunpack.c.h.b16 %v245
  %v856 = vpack.c.b16 %v468, %v464
  %v857 = vpack.c.b16 %v469, %v465
  %v858 = vpack.c.b16 %v470, %v466
  %v859 = vpack.c.b16 %v471, %v467
  %v860 = vpack.c.b16 %v476, %v472
  %v861 = vpack.c.b16 %v477, %v473
  %v862 = vpack.c.b16 %v478, %v474
  %v863 = vpack.c.b16 %v479, %v475
  %v864 = vpack.c.b16 %v484, %v480
  %v865 = vpack.c.b16 %v485, %v481
  %v866 = vpack.c.b16 %v486, %v482
  %v867 = vpack.c.b16 %v487, %v483
  %v868 = vpack.c.b16 %v492, %v488
  %v869 = vpack.c.b16 %v493, %v489
  %v870 = vpack.c.b16 %v494, %v490
  %v871 = vpack.c.b16 %v495, %v491
  %v872 = vpack.c.b16 %v500, %v496
  %v873 = vpack.c.b16 %v501, %v497
  %v874 = vpack.c.b16 %v502, %v498
  %v875 = vpack.c.b16 %v503, %v499
  %v876 = vpack.c.b16 %v508, %v504
  %v877 = vpack.c.b16 %v509, %v505
  %v878 = vpack.c.b16 %v510, %v506
  %v879 = vpack.c.b16 %v511, %v507
  %v880 = vpack.c.b16 %v516, %v512
  %v881 = vpack.c.b16 %v517, %v513
  %v882 = vpack.c.b16 %v518, %v514
  %v883 = vpack.c.b16 %v519, %v515
  %v884 = vpack.c.b16 %v524, %v520
  %v885 = vpack.c.b16 %v525, %v521
  %v886 = vpack.c.b16 %v526, %v522
  %v887 = vpack.c.b16 %v527, %v523
  %v888 = vpack.c.b16 %v532, %v528
  %v889 = vpack.c.b16 %v533, %v529
  %v890 = vpack.c.b16 %v534, %v530
  %v891 = vpack.c.b16 %v535, %v531
  %v892 = vpack.c.b16 %v540, %v536
  %v893 = vpack.c.b16 %v541, %v537
  %v894 = vpack.c.b16 %v542, %v538
  %v895 = vpack.c.b16 %v543, %v539
  %v896 = vpack.c.b16 %v548, %v544
  %v897 = vpack.c.b16 %v549, %v545
  %v898 = vpack.c.b16 %v550, %v546
  %v899 = vpack.c.b16 %v551, %v547
  %v900 = vpack.c.b16 %v556, %v552
  %v901 = vpack.c.b16 %v557, %v553
  %v902 = vpack.c.b16 %v558, %v554
  %v903 = vpack.c.b16 %v559, %v555
  %v904 = vpack.c.b16 %v564, %v560
  %v905 = vpack.c.b16 %v565, %v561
  %v906 = vpack.c.b16 %v566, %v562
  %v907 = vpack.c.b16 %v567, %v563
  %v908 = vpack.c.b16 %v572, %v568
  %v909 = vpack.c.b16 %v573, %v569
  %v910 = vpack.c.b16 %v574, %v570
  %v911 = vpack.c.b16 %v575, %v571
  %v912 = vpack.c.b16 %v580, %v576
  %v913 = vpack.c.b16 %v581, %v577
  %v914 = vpack.c.b16 %v582, %v578
  %v915 = vpack.c.b16 %v583, %v579
  %v916 = vpack.c.b16 %v588, %v584
  %v917 = vpack.c.b16 %v589, %v585
  %v918 = vpack.c.b16 %v590, %v586
  %v919 = vpack.c.b16 %v591, %v587
  %v920 = vpack.c.b16 %v596, %v592
  %v921 = vpack.c.b16 %v597, %v593
  %v922 = vpack.c.b16 %v598, %v594
  %v923 = vpack.c.b16 %v599, %v595
  %v924 = vpack.c.b16 %v604, %v600
  %v925 = vpack.c.b16 %v605, %v601
  %v926 = vpack.c.b16 %v606, %v602
  %v927 = vpack.c.b16 %v607, %v603
  %v928 = vpack.c.b16 %v612, %v608
  %v929 = vpack.c.b16 %v613, %v609
  %v930 = vpack.c.b16 %v614, %v610
  %v931 = vpack.c.b16 %v615, %v611
  %v932 = vpack.c.b16 %v620, %v616
  %v933 = vpack.c.b16 %v621, %v617
  %v934 = vpack.c.b16 %v622, %v618
  %v935 = vpack.c.b16 %v623, %v619
  %v936 = vpack.c.b16 %v628, %v624
  %v937 = vpack.c.b16 %v629, %v625
  %v938 = vpack.c.b16 %v630, %v626
  %v939 = vpack.c.b16 %v631, %v627
  %v940 = vpack.c.b16 %v636, %v632
  %v941 = vpack.c.b16 %v637, %v633
  %v942 = vpack.c.b16 %v638, %v634
  %v943 = vpack.c.b16 %v639, %v635
  %v944 = vpack.c.b16 %v644, %v640
  %v945 = vpack.c.b16 %v645, %v641
  %v946 = vpack.c.b16 %v646, %v642
  %v947 = vpack.c.b16 %v647, %v643
  %v948 = vpack.c.b16 %v652, %v648
  %v949 = vpack.c.b16 %v653, %v649
  %v950 = vpack.c.b16 %v654, %v650
  %v951 = vpack.c.b16 %v655, %v651
  %v952 = vpack.c.b16 %v660, %v656
  %v953 = vpack.c.b16 %v661, %v657
  %v954 = vpack.c.b16 %v662, %v658
  %v955 = vpack.c.b16 %v663, %v659
  %v956 = vpack.c.b16 %v668, %v664
  %v957 = vpack.c.b16 %v669, %v665
  %v958 = vpack.c.b16 %v670, %v666
  %v959 = vpack.c.b16 %v671, %v667
  %v960 = vpack.c.b16 %v676, %v672
  %v961 = vpack.c.b16 %v677, %v673
  %v962 = vpack.c.b16 %v678, %v674
  %v963 = vpack.c.b16 %v679, %v675
  %v964 = vpack.c.b16 %v684, %v680
  %v965 = vpack.c.b16 %v685, %v681
  %v966 = vpack.c.b16 %v686, %v682
  %v967 = vpack.c.b16 %v687, %v683
  %v968 = vpack.c.b16 %v692, %v688
  %v969 = vpack.c.b16 %v693, %v689
  %v970 = vpack.c.b16 %v694, %v690
  %v971 = vpack.c.b16 %v695, %v691
  %v972 = vpack.c.b16 %v700, %v696
  %v973 = vpack.c.b16 %v701, %v697
  %v974 = vpack.c.b16 %v702, %v698
  %v975 = vpack.c.b16 %v703, %v699
  %v976 = vpack.c.b16 %v708, %v704
  %v977 = vpack.c.b16 %v709, %v705
  %v978 = vpack.c.b16 %v710, %v706
  %v979 = vpack.c.b16 %v711, %v707
  %v980 = vpack.c.b16 %v716, %v712
  %v981 = vpack.c.b16 %v717, %v713
  %v982 = vpack.c.b16 %v718, %v714
  %v983 = vpack.c.b16 %v719, %v715
  %v984 = vpack.c.b16 %v724, %v720
  %v985 = vpack.c.b16 %v725, %v721
  %v986 = vpack.c.b16 %v726, %v722
  %v987 = vpack.c.b16 %v727, %v723
  %v988 = vpack.c.b16 %v732, %v728
  %v989 = vpack.c.b16 %v733, %v729
  %v990 = vpack.c.b16 %v734, %v730
  %v991 = vpack.c.b16 %v735, %v731
  %v992 = vpack.c.b16 %v740, %v736
  %v993 = vpack.c.b16 %v741, %v737
  %v994 = vpack.c.b16 %v742, %v738
  %v995 = vpack.c.b16 %v743, %v739
  %v996 = vpack.c.b16 %v748, %v744
  %v997 = vpack.c.b16 %v749, %v745
  %v998 = vpack.c.b16 %v750, %v746
  %v999 = vpack.c.b16 %v751, %v747
  %v1000 = vpack.c.b16 %v756, %v752
  %v1001 = vpack.c.b16 %v757, %v753
  %v1002 = vpack.c.b16 %v758, %v754
  %v1003 = vpack.c.b16 %v759, %v755
  %v1004 = vpack.c.b16 %v764, %v760
  %v1005 = vpack.c.b16 %v765, %v761
  %v1006 = vpack.c.b16 %v766, %v762
  %v1007 = vpack.c.b16 %v767, %v763
  %v1008 = vpack.c.b16 %v772, %v768
  %v1009 = vpack.c.b16 %v773, %v769
  %v1010 = vpack.c.b16 %v774, %v770
  %v1011 = vpack.c.b16 %v775, %v771
  %v1012 = vpack.c.b16 %v780, %v776
  %v1013 = vpack.c.b16 %v781, %v777
  %v1014 = vpack.c.b16 %v782, %v778
  %v1015 = vpack.c.b16 %v783, %v779
  %v1016 = vpack.c.b16 %v788, %v784
  %v1017 = vpack.c.b16 %v789, %v785
  %v1018 = vpack.c.b16 %v790, %v786
  %v1019 = vpack.c.b16 %v791, %v787
  %v1020 = vpack.c.b16 %v796, %v792
  %v1021 = vpack.c.b16 %v797, %v793
  %v1022 = vpack.c.b16 %v798, %v794
  %v1023 = vpack.c.b16 %v799, %v795
  %v1024 = vpack.c.b16 %v804, %v800
  %v1025 = vpack.c.b16 %v805, %v801
  %v1026 = vpack.c.b16 %v806, %v802
  %v1027 = vpack.c.b16 %v807, %v803
  %v1028 = vpack.c.b16 %v812, %v808
  %v1029 = vpack.c.b16 %v813, %v809
  %v1030 = vpack.c.b16 %v814, %v810
  %v1031 = vpack.c.b16 %v815, %v811
  %v1032 = vpack.c.b16 %v820, %v816
  %v1033 = vpack.c.b16 %v821, %v817
  %v1034 = vpack.c.b16 %v822, %v818
  %v1035 = vpack.c.b16 %v823, %v819
  %v1036 = vpack.c.b16 %v828, %v824
  %v1037 = vpack.c.b16 %v829, %v825
  %v1038 = vpack.c.b16 %v830, %v826
  %v1039 = vpack.c.b16 %v831, %v827
  %v1040 = vpack.c.b16 %v836, %v832
  %v1041 = vpack.c.b16 %v837, %v833
  %v1042 = vpack.c.b16 %v838, %v834
  %v1043 = vpack.c.b16 %v839, %v835
  %v1044 = vpack.c.b16 %v844, %v840
  %v1045 = vpack.c.b16 %v845, %v841
  %v1046 = vpack.c.b16 %v846, %v842
  %v1047 = vpack.c.b16 %v847, %v843
  %v1048 = vpack.c.b16 %v852, %v848
  %v1049 = vpack.c.b16 %v853, %v849
  %v1050 = vpack.c.b16 %v854, %v850
  %v1051 = vpack.c.b16 %v855, %v851
  %vm1248 = vcmask 130048
  %v1250 = vsel %vm1248, %v49, 0
  %1252 = vmatprep.subr.bf16.mxu0 %v857
  %1253 = vmatpush1.bf16.msra.mxu0 %v856
  %1254 = vmatprep.subr.bf16.mxu0 %v861
  %1255 = vmatpush1.bf16.msra.mxu0 %v860
  %1256 = vmatprep.subr.bf16.mxu0 %v865
  %1257 = vmatpush1.bf16.msra.mxu0 %v864
  %1258 = vmatprep.subr.bf16.mxu0 %v869
  %1259 = vmatpush1.bf16.msra.mxu0 %v868
  %1260 = vmatprep.subr.bf16.mxu0 %v873
  %1261 = vmatpush1.bf16.msra.mxu0 %v872
  %1262 = vmatprep.subr.bf16.mxu0 %v877
  %1263 = vmatpush1.bf16.msra.mxu0 %v876
  %1264 = vmatprep.subr.bf16.mxu0 %v881
  %1265 = vmatpush1.bf16.msra.mxu0 %v880
  %1266 = vmatprep.subr.bf16.mxu0 %v885
  %1267 = vmatpush1.bf16.msra.mxu0 %v884
  %1268 = vmatprep.subr.bf16.mxu0 %v889
  %1269 = vmatpush1.bf16.msra.mxu0 %v888
  %1270 = vmatprep.subr.bf16.mxu0 %v893
  %1271 = vmatpush1.bf16.msra.mxu0 %v892
  %1272 = vmatprep.subr.bf16.mxu0 %v897
  %1273 = vmatpush1.bf16.msra.mxu0 %v896
  %1274 = vmatprep.subr.bf16.mxu0 %v901
  %1275 = vmatpush1.bf16.msra.mxu0 %v900
  %1276 = vmatprep.subr.bf16.mxu0 %v905
  %1277 = vmatpush1.bf16.msra.mxu0 %v904
  %1278 = vmatprep.subr.bf16.mxu0 %v909
  %1279 = vmatpush1.bf16.msra.mxu0 %v908
  %1280 = vmatprep.subr.bf16.mxu0 %v913
  %1281 = vmatpush1.bf16.msra.mxu0 %v912
  %1282 = vmatprep.subr.bf16.mxu0 %v917
  %1283 = vmatpush1.bf16.msra.mxu0 %v916
  %1284 = vmatprep.mubr.bf16.mxu0 %v44
  %1285 = vmatmul.mubr.bf16.gmra.mrb[0].mxu0 %v43
  %v1286 = vpop.f32.mrb[0].mxu0
  %v1287 = vadd.f32 %v251, %v1286
  %v1288 = vpop.f32.mrb[0].mxu0
  %v1289 = vadd.f32 %v255, %v1288
  %v1290 = vpop.f32.mrb[0].mxu0
  %v1291 = vadd.f32 %v251, %v1290
  %v1292 = vpop.f32.mrb[0].mxu0
  %v1293 = vadd.f32 %v255, %v1292
  %1294 = vdwg.mxu0
  %1295 = vmatprep.subr.bf16.mxu0 %v921
  %1296 = vmatpush1.bf16.msra.mxu0 %v920
  %1297 = vmatprep.subr.bf16.mxu0 %v925
  %1298 = vmatpush1.bf16.msra.mxu0 %v924
  %1299 = vmatprep.subr.bf16.mxu0 %v929
  %1300 = vmatpush1.bf16.msra.mxu0 %v928
  %1301 = vmatprep.subr.bf16.mxu0 %v933
  %1302 = vmatpush1.bf16.msra.mxu0 %v932
  %1303 = vmatprep.subr.bf16.mxu0 %v937
  %1304 = vmatpush1.bf16.msra.mxu0 %v936
  %1305 = vmatprep.subr.bf16.mxu0 %v941
  %1306 = vmatpush1.bf16.msra.mxu0 %v940
  %1307 = vmatprep.subr.bf16.mxu0 %v945
  %1308 = vmatpush1.bf16.msra.mxu0 %v944
  %1309 = vmatprep.subr.bf16.mxu0 %v949
  %1310 = vmatpush1.bf16.msra.mxu0 %v948
  %1311 = vmatprep.subr.bf16.mxu0 %v953
  %1312 = vmatpush1.bf16.msra.mxu0 %v952
  %1313 = vmatprep.subr.bf16.mxu0 %v957
  %1314 = vmatpush1.bf16.msra.mxu0 %v956
  %1315 = vmatprep.subr.bf16.mxu0 %v961
  %1316 = vmatpush1.bf16.msra.mxu0 %v960
  %1317 = vmatprep.subr.bf16.mxu0 %v965
  %1318 = vmatpush1.bf16.msra.mxu0 %v964
  %1319 = vmatprep.subr.bf16.mxu0 %v969
  %1320 = vmatpush1.bf16.msra.mxu0 %v968
  %1321 = vmatprep.subr.bf16.mxu0 %v973
  %1322 = vmatpush1.bf16.msra.mxu0 %v972
  %1323 = vmatprep.subr.bf16.mxu0 %v977
  %1324 = vmatpush1.bf16.msra.mxu0 %v976
  %1325 = vmatprep.subr.bf16.mxu0 %v981
  %1326 = vmatpush1.bf16.msra.mxu0 %v980
  %1327 = vmatprep.mubr.bf16.mxu0 %v46
  %1328 = vmatmul.mubr.bf16.gmra.mrb[0].mxu0 %v45
  %v1329 = vpop.f32.mrb[0].mxu0
  %v1330 = vadd.f32 %v1287, %v1329
  %v1331 = vpop.f32.mrb[0].mxu0
  %v1332 = vadd.f32 %v1289, %v1331
  %v1333 = vpop.f32.mrb[0].mxu0
  %v1334 = vadd.f32 %v1291, %v1333
  %v1335 = vpop.f32.mrb[0].mxu0
  %v1336 = vadd.f32 %v1293, %v1335
  %1337 = vdwg.mxu0
  %1338 = vmatprep.subr.bf16.mxu0 %v985
  %1339 = vmatpush1.bf16.msra.mxu0 %v984
  %1340 = vmatprep.subr.bf16.mxu0 %v989
  %1341 = vmatpush1.bf16.msra.mxu0 %v988
  %1342 = vmatprep.subr.bf16.mxu0 %v993
  %1343 = vmatpush1.bf16.msra.mxu0 %v992
  %1344 = vmatprep.subr.bf16.mxu0 %v997
  %1345 = vmatpush1.bf16.msra.mxu0 %v996
  %1346 = vmatprep.subr.bf16.mxu0 %v1001
  %1347 = vmatpush1.bf16.msra.mxu0 %v1000
  %1348 = vmatprep.subr.bf16.mxu0 %v1005
  %1349 = vmatpush1.bf16.msra.mxu0 %v1004
  %1350 = vmatprep.subr.bf16.mxu0 %v1009
  %1351 = vmatpush1.bf16.msra.mxu0 %v1008
  %1352 = vmatprep.subr.bf16.mxu0 %v1013
  %1353 = vmatpush1.bf16.msra.mxu0 %v1012
  %1354 = vmatprep.subr.bf16.mxu0 %v1017
  %1355 = vmatpush1.bf16.msra.mxu0 %v1016
  %1356 = vmatprep.subr.bf16.mxu0 %v1021
  %1357 = vmatpush1.bf16.msra.mxu0 %v1020
  %1358 = vmatprep.subr.bf16.mxu0 %v1025
  %1359 = vmatpush1.bf16.msra.mxu0 %v1024
  %1360 = vmatprep.subr.bf16.mxu0 %v1029
  %1361 = vmatpush1.bf16.msra.mxu0 %v1028
  %1362 = vmatprep.subr.bf16.mxu0 %v1033
  %1363 = vmatpush1.bf16.msra.mxu0 %v1032
  %1364 = vmatprep.subr.bf16.mxu0 %v1037
  %1365 = vmatpush1.bf16.msra.mxu0 %v1036
  %1366 = vmatprep.subr.bf16.mxu0 %v1041
  %1367 = vmatpush1.bf16.msra.mxu0 %v1040
  %1368 = vmatprep.subr.bf16.mxu0 %v1045
  %1369 = vmatpush1.bf16.msra.mxu0 %v1044
  %1370 = vmatprep.mubr.bf16.mxu0 %v48
  %1371 = vmatmul.mubr.bf16.gmra.mrb[0].mxu0 %v47
  %v1372 = vpop.f32.mrb[0].mxu0
  %v1373 = vadd.f32 %v1330, %v1372
  %v1374 = vpop.f32.mrb[0].mxu0
  %v1375 = vadd.f32 %v1332, %v1374
  %v1376 = vpop.f32.mrb[0].mxu0
  %v1377 = vadd.f32 %v1334, %v1376
  %v1378 = vpop.f32.mrb[0].mxu0
  %v1379 = vadd.f32 %v1336, %v1378
  %1380 = vdwg.mxu0
  %1381 = vmatprep.subr.bf16.mxu0 %v1049
  %1382 = vmatpush1.bf16.msra.mxu0 %v1048
  %1383 = vmatprep.subr.bf16.mxu0 0
  %1384 = vmatpush1.bf16.msra.mxu0 0
  %1385 = vmatprep.subr.bf16.mxu0 0
  %1386 = vmatpush1.bf16.msra.mxu0 0
  %1387 = vmatprep.subr.bf16.mxu0 0
  %1388 = vmatpush1.bf16.msra.mxu0 0
  %1389 = vmatprep.subr.bf16.mxu0 0
  %1390 = vmatpush1.bf16.msra.mxu0 0
  %1391 = vmatprep.subr.bf16.mxu0 0
  %1392 = vmatpush1.bf16.msra.mxu0 0
  %1393 = vmatprep.subr.bf16.mxu0 0
  %1394 = vmatpush1.bf16.msra.mxu0 0
  %1395 = vmatprep.subr.bf16.mxu0 0
  %1396 = vmatpush1.bf16.msra.mxu0 0
  %1397 = vmatprep.subr.bf16.mxu0 0
  %1398 = vmatpush1.bf16.msra.mxu0 0
  %1399 = vmatprep.subr.bf16.mxu0 0
  %1400 = vmatpush1.bf16.msra.mxu0 0
  %1401 = vmatprep.subr.bf16.mxu0 0
  %1402 = vmatpush1.bf16.msra.mxu0 0
  %1403 = vmatprep.subr.bf16.mxu0 0
  %1404 = vmatpush1.bf16.msra.mxu0 0
  %1405 = vmatprep.subr.bf16.mxu0 0
  %1406 = vmatpush1.bf16.msra.mxu0 0
  %1407 = vmatprep.subr.bf16.mxu0 0
  %1408 = vmatpush1.bf16.msra.mxu0 0
  %1409 = vmatprep.subr.bf16.mxu0 0
  %1410 = vmatpush1.bf16.msra.mxu0 0
  %1411 = vmatprep.subr.bf16.mxu0 0
  %1412 = vmatpush1.bf16.msra.mxu0 0
  %1413 = vmatprep.mubr.bf16.mxu0 0
  %1414 = vmatmul.mubr.bf16.gmra.mrb[0].mxu0 %v1250
  %v1415 = vpop.f32.mrb[0].mxu0
  %v1416 = vadd.f32 %v1373, %v1415
  %v1417 = vpop.f32.mrb[0].mxu0
  %v1418 = vadd.f32 %v1375, %v1417
  %v1419 = vpop.f32.mrb[0].mxu0
  %v1420 = vadd.f32 %v1377, %v1419
  %v1421 = vpop.f32.mrb[0].mxu0
  %v1422 = vadd.f32 %v1379, %v1421
  %1423 = vdwg.mxu0
  %1424 = vmatprep.subr.bf16.mxu0 %v859
  %1425 = vmatpush1.bf16.msra.mxu0 %v858
  %1426 = vmatprep.subr.bf16.mxu0 %v863
  %1427 = vmatpush1.bf16.msra.mxu0 %v862
  %1428 = vmatprep.subr.bf16.mxu0 %v867
  %1429 = vmatpush1.bf16.msra.mxu0 %v866
  %1430 = vmatprep.subr.bf16.mxu0 %v871
  %1431 = vmatpush1.bf16.msra.mxu0 %v870
  %1432 = vmatprep.subr.bf16.mxu0 %v875
  %1433 = vmatpush1.bf16.msra.mxu0 %v874
  %1434 = vmatprep.subr.bf16.mxu0 %v879
  %1435 = vmatpush1.bf16.msra.mxu0 %v878
  %1436 = vmatprep.subr.bf16.mxu0 %v883
  %1437 = vmatpush1.bf16.msra.mxu0 %v882
  %1438 = vmatprep.subr.bf16.mxu0 %v887
  %1439 = vmatpush1.bf16.msra.mxu0 %v886
  %1440 = vmatprep.subr.bf16.mxu0 %v891
  %1441 = vmatpush1.bf16.msra.mxu0 %v890
  %1442 = vmatprep.subr.bf16.mxu0 %v895
  %1443 = vmatpush1.bf16.msra.mxu0 %v894
  %1444 = vmatprep.subr.bf16.mxu0 %v899
  %1445 = vmatpush1.bf16.msra.mxu0 %v898
  %1446 = vmatprep.subr.bf16.mxu0 %v903
  %1447 = vmatpush1.bf16.msra.mxu0 %v902
  %1448 = vmatprep.subr.bf16.mxu0 %v907
  %1449 = vmatpush1.bf16.msra.mxu0 %v906
  %1450 = vmatprep.subr.bf16.mxu0 %v911
  %1451 = vmatpush1.bf16.msra.mxu0 %v910
  %1452 = vmatprep.subr.bf16.mxu0 %v915
  %1453 = vmatpush1.bf16.msra.mxu0 %v914
  %1454 = vmatprep.subr.bf16.mxu0 %v919
  %1455 = vmatpush1.bf16.msra.mxu0 %v918
  %1456 = vmatprep.mubr.bf16.mxu0 %v44
  %1457 = vmatmul.mubr.bf16.gmra.mrb[0].mxu0 %v43
  %v1458 = vpop.f32.mrb[0].mxu0
  %v1459 = vadd.f32 %v259, %v1458
  %v1460 = vpop.f32.mrb[0].mxu0
  %v1461 = vadd.f32 %v263, %v1460
  %v1462 = vpop.f32.mrb[0].mxu0
  %v1463 = vadd.f32 %v259, %v1462
  %v1464 = vpop.f32.mrb[0].mxu0
  %v1465 = vadd.f32 %v263, %v1464
  %1466 = vdwg.mxu0
  %1467 = vmatprep.subr.bf16.mxu0 %v923
  %1468 = vmatpush1.bf16.msra.mxu0 %v922
  %1469 = vmatprep.subr.bf16.mxu0 %v927
  %1470 = vmatpush1.bf16.msra.mxu0 %v926
  %1471 = vmatprep.subr.bf16.mxu0 %v931
  %1472 = vmatpush1.bf16.msra.mxu0 %v930
  %1473 = vmatprep.subr.bf16.mxu0 %v935
  %1474 = vmatpush1.bf16.msra.mxu0 %v934
  %1475 = vmatprep.subr.bf16.mxu0 %v939
  %1476 = vmatpush1.bf16.msra.mxu0 %v938
  %1477 = vmatprep.subr.bf16.mxu0 %v943
  %1478 = vmatpush1.bf16.msra.mxu0 %v942
  %1479 = vmatprep.subr.bf16.mxu0 %v947
  %1480 = vmatpush1.bf16.msra.mxu0 %v946
  %1481 = vmatprep.subr.bf16.mxu0 %v951
  %1482 = vmatpush1.bf16.msra.mxu0 %v950
  %1483 = vmatprep.subr.bf16.mxu0 %v955
  %1484 = vmatpush1.bf16.msra.mxu0 %v954
  %1485 = vmatprep.subr.bf16.mxu0 %v959
  %1486 = vmatpush1.bf16.msra.mxu0 %v958
  %1487 = vmatprep.subr.bf16.mxu0 %v963
  %1488 = vmatpush1.bf16.msra.mxu0 %v962
  %1489 = vmatprep.subr.bf16.mxu0 %v967
  %1490 = vmatpush1.bf16.msra.mxu0 %v966
  %1491 = vmatprep.subr.bf16.mxu0 %v971
  %1492 = vmatpush1.bf16.msra.mxu0 %v970
  %1493 = vmatprep.subr.bf16.mxu0 %v975
  %1494 = vmatpush1.bf16.msra.mxu0 %v974
  %1495 = vmatprep.subr.bf16.mxu0 %v979
  %1496 = vmatpush1.bf16.msra.mxu0 %v978
  %1497 = vmatprep.subr.bf16.mxu0 %v983
  %1498 = vmatpush1.bf16.msra.mxu0 %v982
  %1499 = vmatprep.mubr.bf16.mxu0 %v46
  %1500 = vmatmul.mubr.bf16.gmra.mrb[0].mxu0 %v45
  %v1501 = vpop.f32.mrb[0].mxu0
  %v1502 = vadd.f32 %v1459, %v1501
  %v1503 = vpop.f32.mrb[0].mxu0
  %v1504 = vadd.f32 %v1461, %v1503
  %v1505 = vpop.f32.mrb[0].mxu0
  %v1506 = vadd.f32 %v1463, %v1505
  %v1507 = vpop.f32.mrb[0].mxu0
  %v1508 = vadd.f32 %v1465, %v1507
  %1509 = vdwg.mxu0
  %1510 = vmatprep.subr.bf16.mxu0 %v987
  %1511 = vmatpush1.bf16.msra.mxu0 %v986
  %1512 = vmatprep.subr.bf16.mxu0 %v991
  %1513 = vmatpush1.bf16.msra.mxu0 %v990
  %1514 = vmatprep.subr.bf16.mxu0 %v995
  %1515 = vmatpush1.bf16.msra.mxu0 %v994
  %1516 = vmatprep.subr.bf16.mxu0 %v999
  %1517 = vmatpush1.bf16.msra.mxu0 %v998
  %1518 = vmatprep.subr.bf16.mxu0 %v1003
  %1519 = vmatpush1.bf16.msra.mxu0 %v1002
  %1520 = vmatprep.subr.bf16.mxu0 %v1007
  %1521 = vmatpush1.bf16.msra.mxu0 %v1006
  %1522 = vmatprep.subr.bf16.mxu0 %v1011
  %1523 = vmatpush1.bf16.msra.mxu0 %v1010
  %1524 = vmatprep.subr.bf16.mxu0 %v1015
  %1525 = vmatpush1.bf16.msra.mxu0 %v1014
  %1526 = vmatprep.subr.bf16.mxu0 %v1019
  %1527 = vmatpush1.bf16.msra.mxu0 %v1018
  %1528 = vmatprep.subr.bf16.mxu0 %v1023
  %1529 = vmatpush1.bf16.msra.mxu0 %v1022
  %1530 = vmatprep.subr.bf16.mxu0 %v1027
  %1531 = vmatpush1.bf16.msra.mxu0 %v1026
  %1532 = vmatprep.subr.bf16.mxu0 %v1031
  %1533 = vmatpush1.bf16.msra.mxu0 %v1030
  %1534 = vmatprep.subr.bf16.mxu0 %v1035
  %1535 = vmatpush1.bf16.msra.mxu0 %v1034
  %1536 = vmatprep.subr.bf16.mxu0 %v1039
  %1537 = vmatpush1.bf16.msra.mxu0 %v1038
  %1538 = vmatprep.subr.bf16.mxu0 %v1043
  %1539 = vmatpush1.bf16.msra.mxu0 %v1042
  %1540 = vmatprep.subr.bf16.mxu0 %v1047
  %1541 = vmatpush1.bf16.msra.mxu0 %v1046
  %1542 = vmatprep.mubr.bf16.mxu0 %v48
  %1543 = vmatmul.mubr.bf16.gmra.mrb[0].mxu0 %v47
  %v1544 = vpop.f32.mrb[0].mxu0
  %v1545 = vadd.f32 %v1502, %v1544
  %v1546 = vpop.f32.mrb[0].mxu0
  %v1547 = vadd.f32 %v1504, %v1546
  %v1548 = vpop.f32.mrb[0].mxu0
  %v1549 = vadd.f32 %v1506, %v1548
  %v1550 = vpop.f32.mrb[0].mxu0
  %v1551 = vadd.f32 %v1508, %v1550
  %1552 = vdwg.mxu0
  %1553 = vmatprep.subr.bf16.mxu0 %v1051
  %1554 = vmatpush1.bf16.msra.mxu0 %v1050
  %1555 = vmatprep.subr.bf16.mxu0 0
  %1556 = vmatpush1.bf16.msra.mxu0 0
  %1557 = vmatprep.subr.bf16.mxu0 0
  %1558 = vmatpush1.bf16.msra.mxu0 0
  %1559 = vmatprep.subr.bf16.mxu0 0
  %1560 = vmatpush1.bf16.msra.mxu0 0
  %1561 = vmatprep.subr.bf16.mxu0 0
  %1562 = vmatpush1.bf16.msra.mxu0 0
  %1563 = vmatprep.subr.bf16.mxu0 0
  %1564 = vmatpush1.bf16.msra.mxu0 0
  %1565 = vmatprep.subr.bf16.mxu0 0
  %1566 = vmatpush1.bf16.msra.mxu0 0
  %1567 = vmatprep.subr.bf16.mxu0 0
  %1568 = vmatpush1.bf16.msra.mxu0 0
  %1569 = vmatprep.subr.bf16.mxu0 0
  %1570 = vmatpush1.bf16.msra.mxu0 0
  %1571 = vmatprep.subr.bf16.mxu0 0
  %1572 = vmatpush1.bf16.msra.mxu0 0
  %1573 = vmatprep.subr.bf16.mxu0 0
  %1574 = vmatpush1.bf16.msra.mxu0 0
  %1575 = vmatprep.subr.bf16.mxu0 0
  %1576 = vmatpush1.bf16.msra.mxu0 0
  %1577 = vmatprep.subr.bf16.mxu0 0
  %1578 = vmatpush1.bf16.msra.mxu0 0
  %1579 = vmatprep.subr.bf16.mxu0 0
  %1580 = vmatpush1.bf16.msra.mxu0 0
  %1581 = vmatprep.subr.bf16.mxu0 0
  %1582 = vmatpush1.bf16.msra.mxu0 0
  %1583 = vmatprep.subr.bf16.mxu0 0
  %1584 = vmatpush1.bf16.msra.mxu0 0
  %1585 = vmatprep.mubr.bf16.mxu0 0
  %1586 = vmatmul.mubr.bf16.gmra.mrb[0].mxu0 %v1250
  %v1587 = vpop.f32.mrb[0].mxu0
  %v1588 = vadd.f32 %v1545, %v1587
  %v1589 = vpop.f32.mrb[0].mxu0
  %v1590 = vadd.f32 %v1547, %v1589
  %v1591 = vpop.f32.mrb[0].mxu0
  %v1592 = vadd.f32 %v1549, %v1591
  %v1593 = vpop.f32.mrb[0].mxu0
  %v1594 = vadd.f32 %v1551, %v1593
  %1595 = vdwg.mxu0
  %v1596 = vmul.f32 %v1416, 0.2
  %v1597 = vmul.f32 %v1418, 0.2
  %v1598 = vmul.f32 %v1588, 0.2
  %v1599 = vmul.f32 %v1590, 0.2
  %v1600 = vmul.f32 %v1420, 0.2
  %v1601 = vmul.f32 %v1422, 0.2
  %v1602 = vmul.f32 %v1592, 0.2
  %v1603 = vmul.f32 %v1594, 0.2
  %v1604 = vmax.f32 %v1416, %v1596
  %v1605 = vmax.f32 %v1418, %v1597
  %v1606 = vmax.f32 %v1588, %v1598
  %v1607 = vmax.f32 %v1590, %v1599
  %v1608 = vmax.f32 %v1420, %v1600
  %v1609 = vmax.f32 %v1422, %v1601
  %v1610 = vmax.f32 %v1592, %v1602
  %v1611 = vmax.f32 %v1594, %v1603
  %v1612 = vpack.c.bf16 %v1608, %v1604
  %v1613 = vpack.c.bf16 %v1609, %v1605
  %v1614 = vpack.c.bf16 %v1610, %v1606
  %v1615 = vpack.c.bf16 %v1611, %v1607
  %v1616 = vld [vmem:[%s3] sm:$0xff]
  %v1617 = vld [vmem:[%s3 + $0x8] sm:$0xff]
  %v1618 = vld [vmem:[%s3 + $0x10] sm:$0xff]
  %v1619 = vld [vmem:[%s3 + $0x18] sm:$0xff]
  %v1620 = vld [vmem:[%s3 + $0x20] sm:$0xff]
  %v1621 = vld [vmem:[%s3 + $0x28] sm:$0xff]
  %v1622 = vld [vmem:[%s3 + $0x30] sm:$0xff]
  %v1623 = vld [vmem:[%s3 + $0x38] sm:$0xff]
  %v1624 = vld [vmem:[%s3 + $0x40] sm:$0xff]
  %v1625 = vld [vmem:[%s3 + $0x48] sm:$0xff]
  %v1626 = vld [vmem:[%s3 + $0x50] sm:$0xff]
  %v1627 = vld [vmem:[%s3 + $0x58] sm:$0xff]
  %v1628 = vld [vmem:[%s3 + $0x60] sm:$0xff]
  %v1629 = vld [vmem:[%s3 + $0x68] sm:$0xff]
  %v1630 = vld [vmem:[%s3 + $0x70] sm:$0xff]
  %v1631 = vld [vmem:[%s3 + $0x78] sm:$0xff]
  %v1632 = vld [vmem:[%s3 + $0x80] sm:$0xff]
  %v1633 = vld [vmem:[%s3 + $0x88] sm:$0xff]
  %v1634 = vld [vmem:[%s3 + $0x90] sm:$0xff]
  %v1635 = vld [vmem:[%s3 + $0x98] sm:$0xff]
  %v1636 = vld [vmem:[%s3 + $0xa0] sm:$0xff]
  %v1637 = vld [vmem:[%s3 + $0xa8] sm:$0xff]
  %v1638 = vld [vmem:[%s3 + $0xb0] sm:$0xff]
  %v1639 = vld [vmem:[%s3 + $0xb8] sm:$0xff]
  %v1640 = vld [vmem:[%s3 + $0xc0] sm:$0xff]
  %v1641 = vld [vmem:[%s3 + $0xc8] sm:$0xff]
  %v1642 = vld [vmem:[%s3 + $0xd0] sm:$0xff]
  %v1643 = vld [vmem:[%s3 + $0xd8] sm:$0xff]
  %v1644 = vld [vmem:[%s3 + $0xe0] sm:$0xff]
  %v1645 = vld [vmem:[%s3 + $0xe8] sm:$0xff]
  %v1646 = vld [vmem:[%s3 + $0xf0] sm:$0xff]
  %v1647 = vld [vmem:[%s3 + $0xf8] sm:$0xff]
  %v1648 = vld [vmem:[%s3 + $0x100] sm:$0xff]
  %v1649 = vld [vmem:[%s3 + $0x108] sm:$0xff]
  %v1650 = vld [vmem:[%s3 + $0x110] sm:$0xff]
  %v1651 = vld [vmem:[%s3 + $0x118] sm:$0xff]
  %v1652 = vld [vmem:[%s3 + $0x120] sm:$0xff]
  %v1653 = vld [vmem:[%s3 + $0x128] sm:$0xff]
  %v1654 = vld [vmem:[%s3 + $0x130] sm:$0xff]
  %v1655 = vld [vmem:[%s3 + $0x138] sm:$0xff]
  %v1656 = vld [vmem:[%s3 + $0x140] sm:$0xff]
  %v1657 = vld [vmem:[%s3 + $0x148] sm:$0xff]
  %v1658 = vld [vmem:[%s3 + $0x150] sm:$0xff]
  %v1659 = vld [vmem:[%s3 + $0x158] sm:$0xff]
  %v1660 = vld [vmem:[%s3 + $0x160] sm:$0xff]
  %v1661 = vld [vmem:[%s3 + $0x168] sm:$0xff]
  %v1662 = vld [vmem:[%s3 + $0x170] sm:$0xff]
  %v1663 = vld [vmem:[%s3 + $0x178] sm:$0xff]
  %v1664 = vld [vmem:[%s3 + $0x180] sm:$0xff]
  %v1665 = vld [vmem:[%s3 + $0x188] sm:$0xff]
  %v1666 = vld [vmem:[%s3 + $0x190] sm:$0xff]
  %v1667 = vld [vmem:[%s3 + $0x198] sm:$0xff]
  %v1668 = vld [vmem:[%s3 + $0x1a0] sm:$0xff]
  %v1669 = vld [vmem:[%s3 + $0x1a8] sm:$0xff]
  %v1670 = vld [vmem:[%s3 + $0x1b0] sm:$0xff]
  %v1671 = vld [vmem:[%s3 + $0x1b8] sm:$0xff]
  %v1672 = vld [vmem:[%s3 + $0x1c0] sm:$0xff]
  %v1673 = vld [vmem:[%s3 + $0x1c8] sm:$0xff]
  %v1674 = vld [vmem:[%s3 + $0x1d0] sm:$0xff]
  %v1675 = vld [vmem:[%s3 + $0x1d8] sm:$0xff]
  %v1676 = vld [vmem:[%s3 + $0x1e0] sm:$0xff]
  %v1677 = vld [vmem:[%s3 + $0x1e8] sm:$0xff]
  %v1678 = vld [vmem:[%s3 + $0x1f0] sm:$0xff]
  %v1679 = vld [vmem:[%s3 + $0x1f8] sm:$0xff]
  %v1680 = vld [vmem:[%s4] sm:$0x3]
  %v1682 = vlaneseq
  %v1683 = vshrl.u32 %v1682, 7
  %v1684 = vsub.s32 0, %v1683
  %v1685 = vrot.slane %v1680, %v1684
  %v1686 = vlaneseq
  %v1687 = vshrl.u32 %v1686, 7
  %v1688 = vsub.s32 1, %v1687
  %v1689 = vrot.slane %v1680, %v1688
  %v1756 = vunpack.c.l.b16 %v1616
  %v1757 = vunpack.c.h.b16 %v1616
  %v1758 = vunpack.c.l.b16 %v1617
  %v1759 = vunpack.c.h.b16 %v1617
  %v1760 = vunpack.c.l.b16 %v1618
  %v1761 = vunpack.c.h.b16 %v1618
  %v1762 = vunpack.c.l.b16 %v1619
  %v1763 = vunpack.c.h.b16 %v1619
  %v1764 = vunpack.c.l.b16 %v1620
  %v1765 = vunpack.c.h.b16 %v1620
  %v1766 = vunpack.c.l.b16 %v1621
  %v1767 = vunpack.c.h.b16 %v1621
  %v1768 = vunpack.c.l.b16 %v1622
  %v1769 = vunpack.c.h.b16 %v1622
  %v1770 = vunpack.c.l.b16 %v1623
  %v1771 = vunpack.c.h.b16 %v1623
  %v1772 = vunpack.c.l.b16 %v1624
  %v1773 = vunpack.c.h.b16 %v1624
  %v1774 = vunpack.c.l.b16 %v1625
  %v1775 = vunpack.c.h.b16 %v1625
  %v1776 = vunpack.c.l.b16 %v1626
  %v1777 = vunpack.c.h.b16 %v1626
  %v1778 = vunpack.c.l.b16 %v1627
  %v1779 = vunpack.c.h.b16 %v1627
  %v1780 = vunpack.c.l.b16 %v1628
  %v1781 = vunpack.c.h.b16 %v1628
  %v1782 = vunpack.c.l.b16 %v1629
  %v1783 = vunpack.c.h.b16 %v1629
  %v1784 = vunpack.c.l.b16 %v1630
  %v1785 = vunpack.c.h.b16 %v1630
  %v1786 = vunpack.c.l.b16 %v1631
  %v1787 = vunpack.c.h.b16 %v1631
  %v1788 = vunpack.c.l.b16 %v1632
  %v1789 = vunpack.c.h.b16 %v1632
  %v1790 = vunpack.c.l.b16 %v1633
  %v1791 = vunpack.c.h.b16 %v1633
  %v1792 = vunpack.c.l.b16 %v1634
  %v1793 = vunpack.c.h.b16 %v1634
  %v1794 = vunpack.c.l.b16 %v1635
  %v1795 = vunpack.c.h.b16 %v1635
  %v1796 = vunpack.c.l.b16 %v1636
  %v1797 = vunpack.c.h.b16 %v1636
  %v1798 = vunpack.c.l.b16 %v1637
  %v1799 = vunpack.c.h.b16 %v1637
  %v1800 = vunpack.c.l.b16 %v1638
  %v1801 = vunpack.c.h.b16 %v1638
  %v1802 = vunpack.c.l.b16 %v1639
  %v1803 = vunpack.c.h.b16 %v1639
  %v1804 = vunpack.c.l.b16 %v1640
  %v1805 = vunpack.c.h.b16 %v1640
  %v1806 = vunpack.c.l.b16 %v1641
  %v1807 = vunpack.c.h.b16 %v1641
  %v1808 = vunpack.c.l.b16 %v1642
  %v1809 = vunpack.c.h.b16 %v1642
  %v1810 = vunpack.c.l.b16 %v1643
  %v1811 = vunpack.c.h.b16 %v1643
  %v1812 = vunpack.c.l.b16 %v1644
  %v1813 = vunpack.c.h.b16 %v1644
  %v1814 = vunpack.c.l.b16 %v1645
  %v1815 = vunpack.c.h.b16 %v1645
  %v1816 = vunpack.c.l.b16 %v1646
  %v1817 = vunpack.c.h.b16 %v1646
  %v1818 = vunpack.c.l.b16 %v1647
  %v1819 = vunpack.c.h.b16 %v1647
  %v1820 = vunpack.c.l.b16 %v1648
  %v1821 = vunpack.c.h.b16 %v1648
  %v1822 = vunpack.c.l.b16 %v1649
  %v1823 = vunpack.c.h.b16 %v1649
  %v1824 = vunpack.c.l.b16 %v1650
  %v1825 = vunpack.c.h.b16 %v1650
  %v1826 = vunpack.c.l.b16 %v1651
  %v1827 = vunpack.c.h.b16 %v1651
  %v1828 = vunpack.c.l.b16 %v1652
  %v1829 = vunpack.c.h.b16 %v1652
  %v1830 = vunpack.c.l.b16 %v1653
  %v1831 = vunpack.c.h.b16 %v1653
  %v1832 = vunpack.c.l.b16 %v1654
  %v1833 = vunpack.c.h.b16 %v1654
  %v1834 = vunpack.c.l.b16 %v1655
  %v1835 = vunpack.c.h.b16 %v1655
  %v1836 = vunpack.c.l.b16 %v1656
  %v1837 = vunpack.c.h.b16 %v1656
  %v1838 = vunpack.c.l.b16 %v1657
  %v1839 = vunpack.c.h.b16 %v1657
  %v1840 = vunpack.c.l.b16 %v1658
  %v1841 = vunpack.c.h.b16 %v1658
  %v1842 = vunpack.c.l.b16 %v1659
  %v1843 = vunpack.c.h.b16 %v1659
  %v1844 = vunpack.c.l.b16 %v1660
  %v1845 = vunpack.c.h.b16 %v1660
  %v1846 = vunpack.c.l.b16 %v1661
  %v1847 = vunpack.c.h.b16 %v1661
  %v1848 = vunpack.c.l.b16 %v1662
  %v1849 = vunpack.c.h.b16 %v1662
  %v1850 = vunpack.c.l.b16 %v1663
  %v1851 = vunpack.c.h.b16 %v1663
  %v1852 = vunpack.c.l.b16 %v1664
  %v1853 = vunpack.c.h.b16 %v1664
  %v1854 = vunpack.c.l.b16 %v1665
  %v1855 = vunpack.c.h.b16 %v1665
  %v1856 = vunpack.c.l.b16 %v1666
  %v1857 = vunpack.c.h.b16 %v1666
  %v1858 = vunpack.c.l.b16 %v1667
  %v1859 = vunpack.c.h.b16 %v1667
  %v1860 = vunpack.c.l.b16 %v1668
  %v1861 = vunpack.c.h.b16 %v1668
  %v1862 = vunpack.c.l.b16 %v1669
  %v1863 = vunpack.c.h.b16 %v1669
  %v1864 = vunpack.c.l.b16 %v1670
  %v1865 = vunpack.c.h.b16 %v1670
  %v1866 = vunpack.c.l.b16 %v1671
  %v1867 = vunpack.c.h.b16 %v1671
  %v1868 = vunpack.c.l.b16 %v1672
  %v1869 = vunpack.c.h.b16 %v1672
  %v1870 = vunpack.c.l.b16 %v1673
  %v1871 = vunpack.c.h.b16 %v1673
  %v1872 = vunpack.c.l.b16 %v1674
  %v1873 = vunpack.c.h.b16 %v1674
  %v1874 = vunpack.c.l.b16 %v1675
  %v1875 = vunpack.c.h.b16 %v1675
  %v1876 = vunpack.c.l.b16 %v1676
  %v1877 = vunpack.c.h.b16 %v1676
  %v1878 = vunpack.c.l.b16 %v1677
  %v1879 = vunpack.c.h.b16 %v1677
  %v1880 = vunpack.c.l.b16 %v1678
  %v1881 = vunpack.c.h.b16 %v1678
  %v1882 = vunpack.c.l.b16 %v1679
  %v1883 = vunpack.c.h.b16 %v1679
  %v1884 = vpack.c.b16 %v1758, %v1756
  %v1885 = vpack.c.b16 %v1759, %v1757
  %v1886 = vpack.c.b16 %v1762, %v1760
  %v1887 = vpack.c.b16 %v1763, %v1761
  %v1888 = vpack.c.b16 %v1766, %v1764
  %v1889 = vpack.c.b16 %v1767, %v1765
  %v1890 = vpack.c.b16 %v1770, %v1768
  %v1891 = vpack.c.b16 %v1771, %v1769
  %v1892 = vpack.c.b16 %v1774, %v1772
  %v1893 = vpack.c.b16 %v1775, %v1773
  %v1894 = vpack.c.b16 %v1778, %v1776
  %v1895 = vpack.c.b16 %v1779, %v1777
  %v1896 = vpack.c.b16 %v1782, %v1780
  %v1897 = vpack.c.b16 %v1783, %v1781
  %v1898 = vpack.c.b16 %v1786, %v1784
  %v1899 = vpack.c.b16 %v1787, %v1785
  %v1900 = vpack.c.b16 %v1790, %v1788
  %v1901 = vpack.c.b16 %v1791, %v1789
  %v1902 = vpack.c.b16 %v1794, %v1792
  %v1903 = vpack.c.b16 %v1795, %v1793
  %v1904 = vpack.c.b16 %v1798, %v1796
  %v1905 = vpack.c.b16 %v1799, %v1797
  %v1906 = vpack.c.b16 %v1802, %v1800
  %v1907 = vpack.c.b16 %v1803, %v1801
  %v1908 = vpack.c.b16 %v1806, %v1804
  %v1909 = vpack.c.b16 %v1807, %v1805
  %v1910 = vpack.c.b16 %v1810, %v1808
  %v1911 = vpack.c.b16 %v1811, %v1809
  %v1912 = vpack.c.b16 %v1814, %v1812
  %v1913 = vpack.c.b16 %v1815, %v1813
  %v1914 = vpack.c.b16 %v1818, %v1816
  %v1915 = vpack.c.b16 %v1819, %v1817
  %v1916 = vpack.c.b16 %v1822, %v1820
  %v1917 = vpack.c.b16 %v1823, %v1821
  %v1918 = vpack.c.b16 %v1826, %v1824
  %v1919 = vpack.c.b16 %v1827, %v1825
  %v1920 = vpack.c.b16 %v1830, %v1828
  %v1921 = vpack.c.b16 %v1831, %v1829
  %v1922 = vpack.c.b16 %v1834, %v1832
  %v1923 = vpack.c.b16 %v1835, %v1833
  %v1924 = vpack.c.b16 %v1838, %v1836
  %v1925 = vpack.c.b16 %v1839, %v1837
  %v1926 = vpack.c.b16 %v1842, %v1840
  %v1927 = vpack.c.b16 %v1843, %v1841
  %v1928 = vpack.c.b16 %v1846, %v1844
  %v1929 = vpack.c.b16 %v1847, %v1845
  %v1930 = vpack.c.b16 %v1850, %v1848
  %v1931 = vpack.c.b16 %v1851, %v1849
  %v1932 = vpack.c.b16 %v1854, %v1852
  %v1933 = vpack.c.b16 %v1855, %v1853
  %v1934 = vpack.c.b16 %v1858, %v1856
  %v1935 = vpack.c.b16 %v1859, %v1857
  %v1936 = vpack.c.b16 %v1862, %v1860
  %v1937 = vpack.c.b16 %v1863, %v1861
  %v1938 = vpack.c.b16 %v1866, %v1864
  %v1939 = vpack.c.b16 %v1867, %v1865
  %v1940 = vpack.c.b16 %v1870, %v1868
  %v1941 = vpack.c.b16 %v1871, %v1869
  %v1942 = vpack.c.b16 %v1874, %v1872
  %v1943 = vpack.c.b16 %v1875, %v1873
  %v1944 = vpack.c.b16 %v1878, %v1876
  %v1945 = vpack.c.b16 %v1879, %v1877
  %v1946 = vpack.c.b16 %v1882, %v1880
  %v1947 = vpack.c.b16 %v1883, %v1881
  %2012 = vmatprep.subr.bf16.mxu0 %v1885
  %2013 = vmatpush1.bf16.msra.mxu0 %v1884
  %2014 = vmatprep.subr.bf16.mxu0 %v1887
  %2015 = vmatpush1.bf16.msra.mxu0 %v1886
  %2016 = vmatprep.subr.bf16.mxu0 %v1889
  %2017 = vmatpush1.bf16.msra.mxu0 %v1888
  %2018 = vmatprep.subr.bf16.mxu0 %v1891
  %2019 = vmatpush1.bf16.msra.mxu0 %v1890
  %2020 = vmatprep.subr.bf16.mxu0 %v1893
  %2021 = vmatpush1.bf16.msra.mxu0 %v1892
  %2022 = vmatprep.subr.bf16.mxu0 %v1895
  %2023 = vmatpush1.bf16.msra.mxu0 %v1894
  %2024 = vmatprep.subr.bf16.mxu0 %v1897
  %2025 = vmatpush1.bf16.msra.mxu0 %v1896
  %2026 = vmatprep.subr.bf16.mxu0 %v1899
  %2027 = vmatpush1.bf16.msra.mxu0 %v1898
  %2028 = vmatprep.subr.bf16.mxu0 %v1901
  %2029 = vmatpush1.bf16.msra.mxu0 %v1900
  %2030 = vmatprep.subr.bf16.mxu0 %v1903
  %2031 = vmatpush1.bf16.msra.mxu0 %v1902
  %2032 = vmatprep.subr.bf16.mxu0 %v1905
  %2033 = vmatpush1.bf16.msra.mxu0 %v1904
  %2034 = vmatprep.subr.bf16.mxu0 %v1907
  %2035 = vmatpush1.bf16.msra.mxu0 %v1906
  %2036 = vmatprep.subr.bf16.mxu0 %v1909
  %2037 = vmatpush1.bf16.msra.mxu0 %v1908
  %2038 = vmatprep.subr.bf16.mxu0 %v1911
  %2039 = vmatpush1.bf16.msra.mxu0 %v1910
  %2040 = vmatprep.subr.bf16.mxu0 %v1913
  %2041 = vmatpush1.bf16.msra.mxu0 %v1912
  %2042 = vmatprep.subr.bf16.mxu0 %v1915
  %2043 = vmatpush1.bf16.msra.mxu0 %v1914
  %2044 = vmatprep.mubr.bf16.mxu0 %v1613
  %2045 = vmatmul.mubr.bf16.gmra.mrb[0].mxu0 %v1612
  %v2046 = vpop.f32.mrb[0].mxu0
  %v2047 = vadd.f32 %v1685, %v2046
  %v2048 = vpop.f32.mrb[0].mxu0
  %v2049 = vadd.f32 %v1689, %v2048
  %v2050 = vpop.f32.mrb[0].mxu0
  %v2051 = vadd.f32 %v1685, %v2050
  %v2052 = vpop.f32.mrb[0].mxu0
  %v2053 = vadd.f32 %v1689, %v2052
  %2054 = vdwg.mxu0
  %2055 = vmatprep.subr.bf16.mxu0 %v1917
  %2056 = vmatpush1.bf16.msra.mxu0 %v1916
  %2057 = vmatprep.subr.bf16.mxu0 %v1919
  %2058 = vmatpush1.bf16.msra.mxu0 %v1918
  %2059 = vmatprep.subr.bf16.mxu0 %v1921
  %2060 = vmatpush1.bf16.msra.mxu0 %v1920
  %2061 = vmatprep.subr.bf16.mxu0 %v1923
  %2062 = vmatpush1.bf16.msra.mxu0 %v1922
  %2063 = vmatprep.subr.bf16.mxu0 %v1925
  %2064 = vmatpush1.bf16.msra.mxu0 %v1924
  %2065 = vmatprep.subr.bf16.mxu0 %v1927
  %2066 = vmatpush1.bf16.msra.mxu0 %v1926
  %2067 = vmatprep.subr.bf16.mxu0 %v1929
  %2068 = vmatpush1.bf16.msra.mxu0 %v1928
  %2069 = vmatprep.subr.bf16.mxu0 %v1931
  %2070 = vmatpush1.bf16.msra.mxu0 %v1930
  %2071 = vmatprep.subr.bf16.mxu0 %v1933
  %2072 = vmatpush1.bf16.msra.mxu0 %v1932
  %2073 = vmatprep.subr.bf16.mxu0 %v1935
  %2074 = vmatpush1.bf16.msra.mxu0 %v1934
  %2075 = vmatprep.subr.bf16.mxu0 %v1937
  %2076 = vmatpush1.bf16.msra.mxu0 %v1936
  %2077 = vmatprep.subr.bf16.mxu0 %v1939
  %2078 = vmatpush1.bf16.msra.mxu0 %v1938
  %2079 = vmatprep.subr.bf16.mxu0 %v1941
  %2080 = vmatpush1.bf16.msra.mxu0 %v1940
  %2081 = vmatprep.subr.bf16.mxu0 %v1943
  %2082 = vmatpush1.bf16.msra.mxu0 %v1942
  %2083 = vmatprep.subr.bf16.mxu0 %v1945
  %2084 = vmatpush1.bf16.msra.mxu0 %v1944
  %2085 = vmatprep.subr.bf16.mxu0 %v1947
  %2086 = vmatpush1.bf16.msra.mxu0 %v1946
  %2087 = vmatprep.mubr.bf16.mxu0 %v1615
  %2088 = vmatmul.mubr.bf16.gmra.mrb[0].mxu0 %v1614
  %v2089 = vpop.f32.mrb[0].mxu0
  %v2090 = vadd.f32 %v2047, %v2089
  %v2091 = vpop.f32.mrb[0].mxu0
  %v2092 = vadd.f32 %v2049, %v2091
  %v2093 = vpop.f32.mrb[0].mxu0
  %v2094 = vadd.f32 %v2051, %v2093
  %v2095 = vpop.f32.mrb[0].mxu0
  %v2096 = vadd.f32 %v2053, %v2095
  %2097 = vdwg.mxu0
  %v2098 = vmul.f32 %v2090, 0.2
  %v2099 = vmul.f32 %v2092, 0.2
  %v2100 = vmul.f32 %v2094, 0.2
  %v2101 = vmul.f32 %v2096, 0.2
  %v2102 = vmax.f32 %v2090, %v2098
  %v2103 = vmax.f32 %v2092, %v2099
  %v2104 = vmax.f32 %v2094, %v2100
  %v2105 = vmax.f32 %v2096, %v2101
  %v2106 = vld [vmem:[%s5] sm:$0x3]
  %v2108 = vlaneseq
  %v2109 = vshrl.u32 %v2108, 7
  %v2110 = vsub.s32 0, %v2109
  %v2111 = vrot.slane %v2106, %v2110
  %v2112 = vlaneseq
  %v2113 = vshrl.u32 %v2112, 7
  %v2114 = vsub.s32 1, %v2113
  %v2115 = vrot.slane %v2106, %v2114
  %v2118 = vmul.f32 %v2102, %v2111
  %v2119 = vmul.f32 %v2103, %v2115
  %v2120 = vmul.f32 %v2104, %v2111
  %v2121 = vmul.f32 %v2105, %v2115
  %v2122 = vadd.f32 %v2118, %v2119
  %2123 = vadd.xlane.f32.xlu0 %v2122
  %v2124 = vpop.xlane.xlu0 %2123
  %v2125 = vadd.f32 %v2120, %v2121
  %2126 = vadd.xlane.f32.xlu0 %v2125
  %v2127 = vpop.xlane.xlu0 %2126
  %v2128 = vld [vmem:[#allocation2] sm:$0x1]
  %v2130 = vlaneseq
  %v2131 = vshrl.u32 %v2130, 7
  %v2132 = vsub.s32 0, %v2131
  %v2133 = vrot.slane %v2128, %v2132
  %v2135 = vadd.f32 %v2124, %v2133
  %v2136 = vadd.f32 %v2127, %v2133
  %v2137 = vxor.u32 %v2135, 2147483648
  %v2138 = vxor.u32 %v2136, 2147483648
  %v2139 = vmul.f32 %v2137, 1.442695
  %v2140 = vpow.pop %v2139
  %v2141 = vmul.f32 %v2138, 1.442695
  %v2142 = vpow.pop %v2141
  %v2143 = vadd.f32 %v2140, 1.0
  %v2144 = vadd.f32 %v2142, 1.0
  %v2145 = vrcp.pop %v2143
  %v2146 = vmul.f32 1.0, %v2145
  %v2147 = vrcp.pop %v2144
  %v2148 = vmul.f32 1.0, %v2147
  %vm2149 = vcmask 7168
  %2150 = vst.msk [vmem:[%s7] sm:$0xff] %vm2149, %v2146
  %2151 = vst.msk [vmem:[%s7 + $0x8] sm:$0xff] %vm2149, %v2148
  // Predicated region
  $region30: #{discriminator_forward.1} parent=0 // pred_check
    _
  $region31: #{discriminator_forward.1} parent=0 // pred_check_branch
    %2153 = sbr.rel (0) target = $region33
  $region32: #{discriminator_forward.1} parent=0 // pred_region
    _
  $region33: #{discriminator_forward.1} parent=0 // pred_fallthru
    _
  // Predicated region
  $region34: #{discriminator_forward.1} parent=0 // pred_check
    _
  $region35: #{discriminator_forward.1} parent=0 // pred_check_branch
    %2155 = sbr.rel (0) target = $region37
  $region36: #{discriminator_forward.1} parent=0 // pred_region
    _
  $region37: #{discriminator_forward.1} parent=0 // pred_fallthru
    _

</llo_original>
